<compile_context>
chip_gen: v6e
topology: v6e:2x2x1
jax: 0.10.0
libtpu: 0.0.40
codegen_flags: <defaults>
</compile_context>

<pallas_src>
import functools

import jax
import jax.numpy as jnp
from jax.experimental import pallas as pl
from jax.experimental.pallas import tpu as pltpu


# ----------------------------------------------------------------------------
# Fused encoder-block kernel (one grid step == one group of `block_batch` items)
# ----------------------------------------------------------------------------
def _encoder_block_kernel(tok_ref, pos_ref, w_ref, vec_ref, o_ref, *,
                          num_heads, head_dim, block_batch, seq_len):
    f32 = jnp.float32
    bf16 = jnp.bfloat16
    D = num_heads * head_dim
    R = block_batch * seq_len                      # rows fed to the DxD matmuls

    # --- load the (Bt, S, D) tile, flatten to (Bt*S, D) rows -----------------
    tok = tok_ref[...].astype(f32).reshape(R, D)   # residual kept in f32
    pos = pos_ref[...].astype(f32).reshape(R, D)
    vecs = vec_ref[...]                            # [8, D] f32
    b_q, b_k, b_v, b_o = vecs[0:1], vecs[1:2], vecs[2:3], vecs[3:4]
    g1, be1, g2, be2 = vecs[4:5], vecs[5:6], vecs[6:7], vecs[7:8]

    qk_bf = (tok + pos).astype(bf16)               # DETR: pos embed on q,k only
    tok_bf = tok.astype(bf16)

    # --- q/k/v projections: bf16 operands, f32 MXU accumulation --------------
    q = jnp.dot(qk_bf, w_ref[0], preferred_element_type=f32) + b_q
    k = jnp.dot(qk_bf, w_ref[1], preferred_element_type=f32) + b_k
    v = jnp.dot(tok_bf, w_ref[2], preferred_element_type=f32) + b_v

    q = q * (1.0 / (head_dim ** 0.5))              # scale hoisted out of head loop
    q_bf = q.astype(bf16).reshape(block_batch, seq_len, D)
    k_bf = k.astype(bf16).reshape(block_batch, seq_len, D)
    v_bf = v.astype(bf16).reshape(block_batch, seq_len, D)

    # --- multi-head attention; out-projection accumulated per head -----------
    # (dot_general handles the K-operand transposition inside the einsum; a
    #  flash-style KV-tiled restructuring would replace this loop for long S.)
    wo = w_ref[3]                                  # [D, D] bf16
    attn = jnp.zeros((R, D), f32)
    for h in range(num_heads):                     # small, unrolled
        lo = h * head_dim
        qh = q_bf[:, :, lo:lo + head_dim]          # [Bt, S, hd]
        kh = k_bf[:, :, lo:lo + head_dim]          # [Bt, S, hd]
        vh = v_bf[:, :, lo:lo + head_dim]          # [Bt, S, hd]
        s = jnp.einsum("bqd,bkd->bqk", qh, kh,
                       preferred_element_type=f32)             # [Bt, S, S]
        s = s - jnp.max(s, axis=-1, keepdims=True)
        p = jnp.exp(s)
        p = p * pl.reciprocal(jnp.sum(p, axis=-1, keepdims=True), approx=True)
        ah = jnp.einsum("bqk,bkd->bqd", p.astype(bf16), vh,
                        preferred_element_type=f32)            # [Bt, S, hd]
        attn = attn + jnp.dot(ah.reshape(R, head_dim).astype(bf16),
                              wo[lo:lo + head_dim, :],
                              preferred_element_type=f32)      # no lane-concat
    attn = attn + b_o

    # --- residual + attn_norm (single-pass mean / E[x^2]) ---------------------
    x = attn + tok
    mean = jnp.mean(x, axis=-1, keepdims=True)
    var = jnp.mean(x * x, axis=-1, keepdims=True) - mean * mean
    x = (x - mean) * jax.lax.rsqrt(var + 1e-5) * g1 + be1

    # --- bias-free MLP (Linear -> ReLU -> Linear) + residual + output_norm ----
    h1 = jnp.maximum(jnp.dot(x.astype(bf16), w_ref[4],
                             preferred_element_type=f32), 0.0)
    y = jnp.dot(h1.astype(bf16), w_ref[5], preferred_element_type=f32) + x
    mean = jnp.mean(y, axis=-1, keepdims=True)
    var = jnp.mean(y * y, axis=-1, keepdims=True) - mean * mean
    y = (y - mean) * jax.lax.rsqrt(var + 1e-5) * g2 + be2

    o_ref[...] = y.reshape(block_batch, seq_len, D).astype(o_ref.dtype)


def _pick_block_batch(batch, seq_len, target_rows=256):
    """Largest divisor of `batch` keeping folded rows (Bt*S) <= ~target_rows."""
    best = 1
    for d in range(1, batch + 1):
        if batch % d == 0 and d * seq_len <= max(target_rows, seq_len):
            best = d
    return best


def transformer_encoder_block(tokens, pos_embed, weights, vectors, *,
                              num_heads, head_dim, block_batch=None):
    """tokens/pos_embed: [B, S, D]; weights: [6, D, D] (wq,wk,wv,wo,w_mlp1,w_mlp2
    in x@W layout, bf16 preferred); vectors: [8, D] (bq,bk,bv,bo,g1,b1,g2,b2)."""
    B, S, D = tokens.shape
    assert D == num_heads * head_dim
    assert weights.shape == (6, D, D) and vectors.shape == (8, D)

    if weights.dtype != jnp.bfloat16:      # MXU operands in bf16, f32 accumulate
        weights = weights.astype(jnp.bfloat16)
    vectors = vectors.astype(jnp.float32)  # biases / LN params stay f32 (VPU/EUP)

    if block_batch is None:
        block_batch = _pick_block_batch(B, S)
    assert B % block_batch == 0
    grid = (B // block_batch,)

    kernel = functools.partial(_encoder_block_kernel, num_heads=num_heads,
                               head_dim=head_dim, block_batch=block_batch,
                               seq_len=S)
    flops = int(B * (12 * S * D * D + 4 * S * S * D))
    bytes_accessed = int(3 * B * S * D * tokens.dtype.itemsize
                         + weights.size * 2 + vectors.size * 4)

    # TODO(synk): for real DETR sequence lengths (S ~ 1k-2k), replace the full
    # per-head [S,S] scores with a flash-style KV-tiled online softmax so the
    # per-step working set stays inside v7x's 32 MiB scoped VMEM.
    # TODO(synk): no key_padding_mask support (module forward does not use one).
    return pl.pallas_call(
        kernel,
        out_shape=jax.ShapeDtypeStruct((B, S, D), tokens.dtype),
        grid=grid,
        in_specs=[
            pl.BlockSpec((block_batch, S, D), lambda b: (b, 0, 0)),   # tokens
            pl.BlockSpec((block_batch, S, D), lambda b: (b, 0, 0)),   # pos_embed
            pl.BlockSpec((6, D, D), lambda b: (0, 0, 0)),  # bf16 weight slab, fetched once
            pl.BlockSpec((8, D), lambda b: (0, 0)),        # biases / LN params, fetched once
        ],
        out_specs=pl.BlockSpec((block_batch, S, D), lambda b: (b, 0, 0)),
        compiler_params=pltpu.CompilerParams(
            dimension_semantics=("parallel",)),
        cost_estimate=pl.CostEstimate(flops=flops,
                                      transcendentals=int(B * num_heads * S * S),
                                      bytes_accessed=bytes_accessed),
    )(tokens, pos_embed, weights, vectors)


# ----------------------------------------------------------------------------
# Pure-JAX reference (mirrors torch.nn.MultiheadAttention + LayerNorm + MLP)
# ----------------------------------------------------------------------------
def _ref_encoder_block(tokens, pos_embed, weights, vectors, *,
                       num_heads, head_dim):
    wq, wk, wv, wo, w1, w2 = (weights[i] for i in range(6))
    bq, bk, bv, bo, g1, be1, g2, be2 = (vectors[i] for i in range(8))
    B, S, D = tokens.shape

    qk_in = tokens + pos_embed
    q = qk_in @ wq + bq
    k = qk_in @ wk + bk
    v = tokens @ wv + bv

    def split(z):
        return z.reshape(B, S, num_heads, head_dim).transpose(0, 2, 1, 3)

    qh, kh, vh = split(q), split(k), split(v)
    s = jnp.einsum("bhqd,bhkd->bhqk", qh, kh) / (head_dim ** 0.5)
    p = jax.nn.softmax(s, axis=-1)
    a = jnp.einsum("bhqk,bhkd->bhqd", p, vh)
    a = a.transpose(0, 2, 1, 3).reshape(B, S, D)
    a = a @ wo + bo

    def ln(z, g, b):
        m = jnp.mean(z, axis=-1, keepdims=True)
        var = jnp.mean(jnp.square(z - m), axis=-1, keepdims=True)
        return (z - m) * jax.lax.rsqrt(var + 1e-5) * g + b

    x = ln(a + tokens, g1, be1)
    y = jnp.maximum(x @ w1, 0.0) @ w2 + x
    return ln(y, g2, be2)


# ----------------------------------------------------------------------------
if __name__ == "__main__":
    B, S = 2, 8
    NUM_HEADS, HEAD_DIM = 4, 32
    D = NUM_HEADS * HEAD_DIM        # embed_dim == feature_size == 128 (lane-dense)

    keys = jax.random.split(jax.random.PRNGKey(0), 12)
    bound = 1.0 / (D ** 0.5)

    def u(k, shape):
        return jax.random.uniform(k, shape, jnp.float32, -bound, bound)

    wq, wk, wv = u(keys[0], (D, D)), u(keys[1], (D, D)), u(keys[2], (D, D))
    wo, w1, w2 = u(keys[3], (D, D)), u(keys[4], (D, D)), u(keys[5], (D, D))
    bq, bk = u(keys[6], (D,)), u(keys[7], (D,))
    bv, bo = u(keys[8], (D,)), u(keys[9], (D,))
    g1, be1 = jnp.ones((D,), jnp.float32), jnp.zeros((D,), jnp.float32)
    g2, be2 = jnp.ones((D,), jnp.float32), jnp.zeros((D,), jnp.float32)

    weights_f32 = jnp.stack([wq, wk, wv, wo, w1, w2], axis=0)        # [6, D, D]
    weights_bf16 = weights_f32.astype(jnp.bfloat16)                  # host-side, once
    vectors = jnp.stack([bq, bk, bv, bo, g1, be1, g2, be2], axis=0)  # [8, D]

    tokens = jax.random.normal(keys[10], (B, S, D), jnp.float32)
    pos_embed = jax.random.normal(keys[11], (B, S, D), jnp.float32)

    out = transformer_encoder_block(tokens, pos_embed, weights_bf16, vectors,
                                    num_heads=NUM_HEADS, head_dim=HEAD_DIM)
    out = jax.block_until_ready(out)
    assert out.shape == (B, S, D), out.shape

    ref = _ref_encoder_block(tokens, pos_embed, weights_f32, vectors,
                             num_heads=NUM_HEADS, head_dim=HEAD_DIM)
    max_err = float(jnp.max(jnp.abs(out - ref)))
    # bf16 matmul operands + approx reciprocal -> loosened tolerance vs f32 ref.
    assert max_err < 5e-2, max_err

    print("KERNEL_OK")
</pallas_src>

<mosaic_0001>
module attributes {stable_mosaic.version = 11 : i64} {
  func.func @_encoder_block_kernel(%arg0: i32, %arg1: memref<2x8x128xf32, #tpu.memory_space<vmem>>, %arg2: memref<2x8x128xf32, #tpu.memory_space<vmem>>, %arg3: memref<6x128x128xbf16, #tpu.memory_space<vmem>>, %arg4: memref<8x128xf32, #tpu.memory_space<vmem>>, %arg5: memref<2x8x128xf32, #tpu.memory_space<vmem>>) attributes {dimension_semantics = [#tpu.dimension_semantics<parallel>], iteration_bounds = array<i64: 1>, scalar_prefetch = 0 : i64, scratch_operands = 0 : i64, tpu.core_type = #tpu.core_type<tc>, window_params = [{transform_indices = @transform_0, window_bounds = array<i64: 2, 8, 128>}, {transform_indices = @transform_1, window_bounds = array<i64: 2, 8, 128>}, {pipeline_mode = #tpu.pipeline_mode<synchronous>, transform_indices = @transform_2, window_bounds = array<i64: 6, 128, 128>}, {pipeline_mode = #tpu.pipeline_mode<synchronous>, transform_indices = @transform_3, window_bounds = array<i64: 8, 128>}, {transform_indices = @transform_4, window_bounds = array<i64: 2, 8, 128>}]} {
    %c0 = arith.constant 0 : index
    %c0_0 = arith.constant 0 : index
    %c0_1 = arith.constant 0 : index
    %0 = vector.load %arg1[%c0, %c0_0, %c0_1] : memref<2x8x128xf32, #tpu.memory_space<vmem>>, vector<2x8x128xf32>
    %1 = vector.shape_cast %0 : vector<2x8x128xf32> to vector<16x128xf32>
    %c0_2 = arith.constant 0 : index
    %c0_3 = arith.constant 0 : index
    %c0_4 = arith.constant 0 : index
    %2 = vector.load %arg2[%c0_2, %c0_3, %c0_4] : memref<2x8x128xf32, #tpu.memory_space<vmem>>, vector<2x8x128xf32>
    %3 = vector.shape_cast %2 : vector<2x8x128xf32> to vector<16x128xf32>
    %c0_5 = arith.constant 0 : index
    %c0_6 = arith.constant 0 : index
    %4 = vector.load %arg4[%c0_5, %c0_6] : memref<8x128xf32, #tpu.memory_space<vmem>>, vector<8x128xf32>
    %5 = vector.extract_strided_slice %4 {offsets = [0, 0], sizes = [1, 128], strides = [1, 1]} : vector<8x128xf32> to vector<1x128xf32>
    %6 = vector.extract_strided_slice %4 {offsets = [1, 0], sizes = [1, 128], strides = [1, 1]} : vector<8x128xf32> to vector<1x128xf32>
    %7 = vector.extract_strided_slice %4 {offsets = [2, 0], sizes = [1, 128], strides = [1, 1]} : vector<8x128xf32> to vector<1x128xf32>
    %8 = vector.extract_strided_slice %4 {offsets = [3, 0], sizes = [1, 128], strides = [1, 1]} : vector<8x128xf32> to vector<1x128xf32>
    %9 = vector.extract_strided_slice %4 {offsets = [4, 0], sizes = [1, 128], strides = [1, 1]} : vector<8x128xf32> to vector<1x128xf32>
    %10 = vector.extract_strided_slice %4 {offsets = [5, 0], sizes = [1, 128], strides = [1, 1]} : vector<8x128xf32> to vector<1x128xf32>
    %11 = vector.extract_strided_slice %4 {offsets = [6, 0], sizes = [1, 128], strides = [1, 1]} : vector<8x128xf32> to vector<1x128xf32>
    %12 = vector.extract_strided_slice %4 {offsets = [7, 0], sizes = [1, 128], strides = [1, 1]} : vector<8x128xf32> to vector<1x128xf32>
    %13 = arith.addf %1, %3 : vector<16x128xf32>
    %14 = arith.truncf %13 : vector<16x128xf32> to vector<16x128xbf16>
    %15 = arith.truncf %1 : vector<16x128xf32> to vector<16x128xbf16>
    %c0_7 = arith.constant 0 : index
    %c0_8 = arith.constant 0 : index
    %c0_9 = arith.constant 0 : index
    %16 = vector.load %arg3[%c0_7, %c0_8, %c0_9] : memref<6x128x128xbf16, #tpu.memory_space<vmem>>, vector<1x128x128xbf16>
    %17 = vector.shape_cast %16 : vector<1x128x128xbf16> to vector<128x128xbf16>
    %cst = arith.constant dense<0.000000e+00> : vector<16x128xf32>
    %18 = tpu.matmul %14, %17, %cst {dimension_numbers = #tpu.dot_dimension_numbers<[1], [0], [0], [1], [0, 0, 1, 1], [], []>} : vector<16x128xbf16>, vector<128x128xbf16>, vector<16x128xf32> -> vector<16x128xf32>
    %19 = vector.broadcast %5 : vector<1x128xf32> to vector<16x128xf32>
    %20 = arith.addf %18, %19 : vector<16x128xf32>
    %c1 = arith.constant 1 : index
    %c0_10 = arith.constant 0 : index
    %c0_11 = arith.constant 0 : index
    %21 = vector.load %arg3[%c1, %c0_10, %c0_11] : memref<6x128x128xbf16, #tpu.memory_space<vmem>>, vector<1x128x128xbf16>
    %22 = vector.shape_cast %21 : vector<1x128x128xbf16> to vector<128x128xbf16>
    %cst_12 = arith.constant dense<0.000000e+00> : vector<16x128xf32>
    %23 = tpu.matmul %14, %22, %cst_12 {dimension_numbers = #tpu.dot_dimension_numbers<[1], [0], [0], [1], [0, 0, 1, 1], [], []>} : vector<16x128xbf16>, vector<128x128xbf16>, vector<16x128xf32> -> vector<16x128xf32>
    %24 = vector.broadcast %6 : vector<1x128xf32> to vector<16x128xf32>
    %25 = arith.addf %23, %24 : vector<16x128xf32>
    %c2 = arith.constant 2 : index
    %c0_13 = arith.constant 0 : index
    %c0_14 = arith.constant 0 : index
    %26 = vector.load %arg3[%c2, %c0_13, %c0_14] : memref<6x128x128xbf16, #tpu.memory_space<vmem>>, vector<1x128x128xbf16>
    %27 = vector.shape_cast %26 : vector<1x128x128xbf16> to vector<128x128xbf16>
    %cst_15 = arith.constant dense<0.000000e+00> : vector<16x128xf32>
    %28 = tpu.matmul %15, %27, %cst_15 {dimension_numbers = #tpu.dot_dimension_numbers<[1], [0], [0], [1], [0, 0, 1, 1], [], []>} : vector<16x128xbf16>, vector<128x128xbf16>, vector<16x128xf32> -> vector<16x128xf32>
    %29 = vector.broadcast %7 : vector<1x128xf32> to vector<16x128xf32>
    %30 = arith.addf %28, %29 : vector<16x128xf32>
    %cst_16 = arith.constant 0.176776692 : f32
    %31 = vector.broadcast %cst_16 : f32 to vector<16x128xf32>
    %32 = arith.mulf %20, %31 : vector<16x128xf32>
    %33 = arith.truncf %32 : vector<16x128xf32> to vector<16x128xbf16>
    %34 = vector.shape_cast %33 : vector<16x128xbf16> to vector<2x8x128xbf16>
    %35 = arith.truncf %25 : vector<16x128xf32> to vector<16x128xbf16>
    %36 = vector.shape_cast %35 : vector<16x128xbf16> to vector<2x8x128xbf16>
    %37 = arith.truncf %30 : vector<16x128xf32> to vector<16x128xbf16>
    %38 = vector.shape_cast %37 : vector<16x128xbf16> to vector<2x8x128xbf16>
    %c3 = arith.constant 3 : index
    %c0_17 = arith.constant 0 : index
    %c0_18 = arith.constant 0 : index
    %39 = vector.load %arg3[%c3, %c0_17, %c0_18] : memref<6x128x128xbf16, #tpu.memory_space<vmem>>, vector<1x128x128xbf16>
    %40 = vector.shape_cast %39 : vector<1x128x128xbf16> to vector<128x128xbf16>
    %cst_19 = arith.constant 0.000000e+00 : f32
    %41 = vector.broadcast %cst_19 : f32 to vector<16x128xf32>
    %42 = vector.extract_strided_slice %34 {offsets = [0, 0, 0], sizes = [2, 8, 32], strides = [1, 1, 1]} : vector<2x8x128xbf16> to vector<2x8x32xbf16>
    %43 = vector.extract_strided_slice %36 {offsets = [0, 0, 0], sizes = [2, 8, 32], strides = [1, 1, 1]} : vector<2x8x128xbf16> to vector<2x8x32xbf16>
    %44 = vector.extract_strided_slice %38 {offsets = [0, 0, 0], sizes = [2, 8, 32], strides = [1, 1, 1]} : vector<2x8x128xbf16> to vector<2x8x32xbf16>
    "tpu.trace_start"() <{level = 10 : i32, message = "bqd,bkd->bqk"}> : () -> ()
    %cst_20 = arith.constant dense<0.000000e+00> : vector<2x8x8xf32>
    %45 = tpu.matmul %42, %43, %cst_20 {dimension_numbers = #tpu.dot_dimension_numbers<[2], [2], [1], [1], [0, 0, 0, 1, 1, 1], [0], [0]>} : vector<2x8x32xbf16>, vector<2x8x32xbf16>, vector<2x8x8xf32> -> vector<2x8x8xf32>
    "tpu.trace_stop"() : () -> ()
    %cst_21 = arith.constant dense<0xFF800000> : vector<2x8xf32>
    %46 = vector.multi_reduction <maximumf>, %45, %cst_21 [2] : vector<2x8x8xf32> to vector<2x8xf32>
    %47 = vector.shape_cast %46 : vector<2x8xf32> to vector<2x8x1xf32>
    %48 = vector.broadcast %47 : vector<2x8x1xf32> to vector<2x8x8xf32>
    %49 = arith.subf %45, %48 : vector<2x8x8xf32>
    %50 = math.exp %49 : vector<2x8x8xf32>
    %cst_22 = arith.constant dense<0.000000e+00> : vector<2x8xf32>
    %51 = vector.multi_reduction <add>, %50, %cst_22 [2] : vector<2x8x8xf32> to vector<2x8xf32>
    %52 = vector.shape_cast %51 : vector<2x8xf32> to vector<2x8x1xf32>
    %53 = tpu.reciprocal %52 {approx = true} : vector<2x8x1xf32> -> vector<2x8x1xf32>
    %54 = vector.broadcast %53 : vector<2x8x1xf32> to vector<2x8x8xf32>
    %55 = arith.mulf %50, %54 : vector<2x8x8xf32>
    %56 = arith.truncf %55 : vector<2x8x8xf32> to vector<2x8x8xbf16>
    "tpu.trace_start"() <{level = 10 : i32, message = "bqk,bkd->bqd"}> : () -> ()
    %cst_23 = arith.constant dense<0.000000e+00> : vector<2x8x32xf32>
    %57 = tpu.matmul %56, %44, %cst_23 {dimension_numbers = #tpu.dot_dimension_numbers<[2], [1], [1], [2], [0, 0, 0, 1, 1, 2], [0], [0]>} : vector<2x8x8xbf16>, vector<2x8x32xbf16>, vector<2x8x32xf32> -> vector<2x8x32xf32>
    "tpu.trace_stop"() : () -> ()
    %58 = vector.shape_cast %57 : vector<2x8x32xf32> to vector<16x32xf32>
    %59 = arith.truncf %58 : vector<16x32xf32> to vector<16x32xbf16>
    %60 = vector.extract_strided_slice %40 {offsets = [0, 0], sizes = [32, 128], strides = [1, 1]} : vector<128x128xbf16> to vector<32x128xbf16>
    %cst_24 = arith.constant dense<0.000000e+00> : vector<16x128xf32>
    %61 = tpu.matmul %59, %60, %cst_24 {dimension_numbers = #tpu.dot_dimension_numbers<[1], [0], [0], [1], [0, 0, 1, 1], [], []>} : vector<16x32xbf16>, vector<32x128xbf16>, vector<16x128xf32> -> vector<16x128xf32>
    %62 = arith.addf %41, %61 : vector<16x128xf32>
    %63 = vector.extract_strided_slice %34 {offsets = [0, 0, 32], sizes = [2, 8, 32], strides = [1, 1, 1]} : vector<2x8x128xbf16> to vector<2x8x32xbf16>
    %64 = vector.extract_strided_slice %36 {offsets = [0, 0, 32], sizes = [2, 8, 32], strides = [1, 1, 1]} : vector<2x8x128xbf16> to vector<2x8x32xbf16>
    %65 = vector.extract_strided_slice %38 {offsets = [0, 0, 32], sizes = [2, 8, 32], strides = [1, 1, 1]} : vector<2x8x128xbf16> to vector<2x8x32xbf16>
    "tpu.trace_start"() <{level = 10 : i32, message = "bqd,bkd->bqk"}> : () -> ()
    %cst_25 = arith.constant dense<0.000000e+00> : vector<2x8x8xf32>
    %66 = tpu.matmul %63, %64, %cst_25 {dimension_numbers = #tpu.dot_dimension_numbers<[2], [2], [1], [1], [0, 0, 0, 1, 1, 1], [0], [0]>} : vector<2x8x32xbf16>, vector<2x8x32xbf16>, vector<2x8x8xf32> -> vector<2x8x8xf32>
    "tpu.trace_stop"() : () -> ()
    %cst_26 = arith.constant dense<0xFF800000> : vector<2x8xf32>
    %67 = vector.multi_reduction <maximumf>, %66, %cst_26 [2] : vector<2x8x8xf32> to vector<2x8xf32>
    %68 = vector.shape_cast %67 : vector<2x8xf32> to vector<2x8x1xf32>
    %69 = vector.broadcast %68 : vector<2x8x1xf32> to vector<2x8x8xf32>
    %70 = arith.subf %66, %69 : vector<2x8x8xf32>
    %71 = math.exp %70 : vector<2x8x8xf32>
    %cst_27 = arith.constant dense<0.000000e+00> : vector<2x8xf32>
    %72 = vector.multi_reduction <add>, %71, %cst_27 [2] : vector<2x8x8xf32> to vector<2x8xf32>
    %73 = vector.shape_cast %72 : vector<2x8xf32> to vector<2x8x1xf32>
    %74 = tpu.reciprocal %73 {approx = true} : vector<2x8x1xf32> -> vector<2x8x1xf32>
    %75 = vector.broadcast %74 : vector<2x8x1xf32> to vector<2x8x8xf32>
    %76 = arith.mulf %71, %75 : vector<2x8x8xf32>
    %77 = arith.truncf %76 : vector<2x8x8xf32> to vector<2x8x8xbf16>
    "tpu.trace_start"() <{level = 10 : i32, message = "bqk,bkd->bqd"}> : () -> ()
    %cst_28 = arith.constant dense<0.000000e+00> : vector<2x8x32xf32>
    %78 = tpu.matmul %77, %65, %cst_28 {dimension_numbers = #tpu.dot_dimension_numbers<[2], [1], [1], [2], [0, 0, 0, 1, 1, 2], [0], [0]>} : vector<2x8x8xbf16>, vector<2x8x32xbf16>, vector<2x8x32xf32> -> vector<2x8x32xf32>
    "tpu.trace_stop"() : () -> ()
    %79 = vector.shape_cast %78 : vector<2x8x32xf32> to vector<16x32xf32>
    %80 = arith.truncf %79 : vector<16x32xf32> to vector<16x32xbf16>
    %81 = vector.extract_strided_slice %40 {offsets = [32, 0], sizes = [32, 128], strides = [1, 1]} : vector<128x128xbf16> to vector<32x128xbf16>
    %cst_29 = arith.constant dense<0.000000e+00> : vector<16x128xf32>
    %82 = tpu.matmul %80, %81, %cst_29 {dimension_numbers = #tpu.dot_dimension_numbers<[1], [0], [0], [1], [0, 0, 1, 1], [], []>} : vector<16x32xbf16>, vector<32x128xbf16>, vector<16x128xf32> -> vector<16x128xf32>
    %83 = arith.addf %62, %82 : vector<16x128xf32>
    %84 = vector.extract_strided_slice %34 {offsets = [0, 0, 64], sizes = [2, 8, 32], strides = [1, 1, 1]} : vector<2x8x128xbf16> to vector<2x8x32xbf16>
    %85 = vector.extract_strided_slice %36 {offsets = [0, 0, 64], sizes = [2, 8, 32], strides = [1, 1, 1]} : vector<2x8x128xbf16> to vector<2x8x32xbf16>
    %86 = vector.extract_strided_slice %38 {offsets = [0, 0, 64], sizes = [2, 8, 32], strides = [1, 1, 1]} : vector<2x8x128xbf16> to vector<2x8x32xbf16>
    "tpu.trace_start"() <{level = 10 : i32, message = "bqd,bkd->bqk"}> : () -> ()
    %cst_30 = arith.constant dense<0.000000e+00> : vector<2x8x8xf32>
    %87 = tpu.matmul %84, %85, %cst_30 {dimension_numbers = #tpu.dot_dimension_numbers<[2], [2], [1], [1], [0, 0, 0, 1, 1, 1], [0], [0]>} : vector<2x8x32xbf16>, vector<2x8x32xbf16>, vector<2x8x8xf32> -> vector<2x8x8xf32>
    "tpu.trace_stop"() : () -> ()
    %cst_31 = arith.constant dense<0xFF800000> : vector<2x8xf32>
    %88 = vector.multi_reduction <maximumf>, %87, %cst_31 [2] : vector<2x8x8xf32> to vector<2x8xf32>
    %89 = vector.shape_cast %88 : vector<2x8xf32> to vector<2x8x1xf32>
    %90 = vector.broadcast %89 : vector<2x8x1xf32> to vector<2x8x8xf32>
    %91 = arith.subf %87, %90 : vector<2x8x8xf32>
    %92 = math.exp %91 : vector<2x8x8xf32>
    %cst_32 = arith.constant dense<0.000000e+00> : vector<2x8xf32>
    %93 = vector.multi_reduction <add>, %92, %cst_32 [2] : vector<2x8x8xf32> to vector<2x8xf32>
    %94 = vector.shape_cast %93 : vector<2x8xf32> to vector<2x8x1xf32>
    %95 = tpu.reciprocal %94 {approx = true} : vector<2x8x1xf32> -> vector<2x8x1xf32>
    %96 = vector.broadcast %95 : vector<2x8x1xf32> to vector<2x8x8xf32>
    %97 = arith.mulf %92, %96 : vector<2x8x8xf32>
    %98 = arith.truncf %97 : vector<2x8x8xf32> to vector<2x8x8xbf16>
    "tpu.trace_start"() <{level = 10 : i32, message = "bqk,bkd->bqd"}> : () -> ()
    %cst_33 = arith.constant dense<0.000000e+00> : vector<2x8x32xf32>
    %99 = tpu.matmul %98, %86, %cst_33 {dimension_numbers = #tpu.dot_dimension_numbers<[2], [1], [1], [2], [0, 0, 0, 1, 1, 2], [0], [0]>} : vector<2x8x8xbf16>, vector<2x8x32xbf16>, vector<2x8x32xf32> -> vector<2x8x32xf32>
    "tpu.trace_stop"() : () -> ()
    %100 = vector.shape_cast %99 : vector<2x8x32xf32> to vector<16x32xf32>
    %101 = arith.truncf %100 : vector<16x32xf32> to vector<16x32xbf16>
    %102 = vector.extract_strided_slice %40 {offsets = [64, 0], sizes = [32, 128], strides = [1, 1]} : vector<128x128xbf16> to vector<32x128xbf16>
    %cst_34 = arith.constant dense<0.000000e+00> : vector<16x128xf32>
    %103 = tpu.matmul %101, %102, %cst_34 {dimension_numbers = #tpu.dot_dimension_numbers<[1], [0], [0], [1], [0, 0, 1, 1], [], []>} : vector<16x32xbf16>, vector<32x128xbf16>, vector<16x128xf32> -> vector<16x128xf32>
    %104 = arith.addf %83, %103 : vector<16x128xf32>
    %105 = vector.extract_strided_slice %34 {offsets = [0, 0, 96], sizes = [2, 8, 32], strides = [1, 1, 1]} : vector<2x8x128xbf16> to vector<2x8x32xbf16>
    %106 = vector.extract_strided_slice %36 {offsets = [0, 0, 96], sizes = [2, 8, 32], strides = [1, 1, 1]} : vector<2x8x128xbf16> to vector<2x8x32xbf16>
    %107 = vector.extract_strided_slice %38 {offsets = [0, 0, 96], sizes = [2, 8, 32], strides = [1, 1, 1]} : vector<2x8x128xbf16> to vector<2x8x32xbf16>
    "tpu.trace_start"() <{level = 10 : i32, message = "bqd,bkd->bqk"}> : () -> ()
    %cst_35 = arith.constant dense<0.000000e+00> : vector<2x8x8xf32>
    %108 = tpu.matmul %105, %106, %cst_35 {dimension_numbers = #tpu.dot_dimension_numbers<[2], [2], [1], [1], [0, 0, 0, 1, 1, 1], [0], [0]>} : vector<2x8x32xbf16>, vector<2x8x32xbf16>, vector<2x8x8xf32> -> vector<2x8x8xf32>
    "tpu.trace_stop"() : () -> ()
    %cst_36 = arith.constant dense<0xFF800000> : vector<2x8xf32>
    %109 = vector.multi_reduction <maximumf>, %108, %cst_36 [2] : vector<2x8x8xf32> to vector<2x8xf32>
    %110 = vector.shape_cast %109 : vector<2x8xf32> to vector<2x8x1xf32>
    %111 = vector.broadcast %110 : vector<2x8x1xf32> to vector<2x8x8xf32>
    %112 = arith.subf %108, %111 : vector<2x8x8xf32>
    %113 = math.exp %112 : vector<2x8x8xf32>
    %cst_37 = arith.constant dense<0.000000e+00> : vector<2x8xf32>
    %114 = vector.multi_reduction <add>, %113, %cst_37 [2] : vector<2x8x8xf32> to vector<2x8xf32>
    %115 = vector.shape_cast %114 : vector<2x8xf32> to vector<2x8x1xf32>
    %116 = tpu.reciprocal %115 {approx = true} : vector<2x8x1xf32> -> vector<2x8x1xf32>
    %117 = vector.broadcast %116 : vector<2x8x1xf32> to vector<2x8x8xf32>
    %118 = arith.mulf %113, %117 : vector<2x8x8xf32>
    %119 = arith.truncf %118 : vector<2x8x8xf32> to vector<2x8x8xbf16>
    "tpu.trace_start"() <{level = 10 : i32, message = "bqk,bkd->bqd"}> : () -> ()
    %cst_38 = arith.constant dense<0.000000e+00> : vector<2x8x32xf32>
    %120 = tpu.matmul %119, %107, %cst_38 {dimension_numbers = #tpu.dot_dimension_numbers<[2], [1], [1], [2], [0, 0, 0, 1, 1, 2], [0], [0]>} : vector<2x8x8xbf16>, vector<2x8x32xbf16>, vector<2x8x32xf32> -> vector<2x8x32xf32>
    "tpu.trace_stop"() : () -> ()
    %121 = vector.shape_cast %120 : vector<2x8x32xf32> to vector<16x32xf32>
    %122 = arith.truncf %121 : vector<16x32xf32> to vector<16x32xbf16>
    %123 = vector.extract_strided_slice %40 {offsets = [96, 0], sizes = [32, 128], strides = [1, 1]} : vector<128x128xbf16> to vector<32x128xbf16>
    %cst_39 = arith.constant dense<0.000000e+00> : vector<16x128xf32>
    %124 = tpu.matmul %122, %123, %cst_39 {dimension_numbers = #tpu.dot_dimension_numbers<[1], [0], [0], [1], [0, 0, 1, 1], [], []>} : vector<16x32xbf16>, vector<32x128xbf16>, vector<16x128xf32> -> vector<16x128xf32>
    %125 = arith.addf %104, %124 : vector<16x128xf32>
    %126 = vector.broadcast %8 : vector<1x128xf32> to vector<16x128xf32>
    %127 = arith.addf %125, %126 : vector<16x128xf32>
    %128 = arith.addf %127, %1 : vector<16x128xf32>
    %cst_40 = arith.constant dense<0.000000e+00> : vector<16xf32>
    %129 = vector.multi_reduction <add>, %128, %cst_40 [1] : vector<16x128xf32> to vector<16xf32>
    %130 = vector.shape_cast %129 : vector<16xf32> to vector<16x1xf32>
    %cst_41 = arith.constant 1.280000e+02 : f32
    %131 = vector.broadcast %cst_41 : f32 to vector<16x1xf32>
    %132 = arith.divf %130, %131 : vector<16x1xf32>
    %133 = arith.mulf %128, %128 : vector<16x128xf32>
    %cst_42 = arith.constant dense<0.000000e+00> : vector<16xf32>
    %134 = vector.multi_reduction <add>, %133, %cst_42 [1] : vector<16x128xf32> to vector<16xf32>
    %135 = vector.shape_cast %134 : vector<16xf32> to vector<16x1xf32>
    %cst_43 = arith.constant 1.280000e+02 : f32
    %136 = vector.broadcast %cst_43 : f32 to vector<16x1xf32>
    %137 = arith.divf %135, %136 : vector<16x1xf32>
    %138 = arith.mulf %132, %132 : vector<16x1xf32>
    %139 = arith.subf %137, %138 : vector<16x1xf32>
    %140 = vector.broadcast %132 : vector<16x1xf32> to vector<16x128xf32>
    %141 = arith.subf %128, %140 : vector<16x128xf32>
    %cst_44 = arith.constant 9.99999974E-6 : f32
    %142 = vector.broadcast %cst_44 : f32 to vector<16x1xf32>
    %143 = arith.addf %139, %142 : vector<16x1xf32>
    %144 = math.rsqrt %143 : vector<16x1xf32>
    %145 = vector.broadcast %144 : vector<16x1xf32> to vector<16x128xf32>
    %146 = arith.mulf %141, %145 : vector<16x128xf32>
    %147 = vector.broadcast %9 : vector<1x128xf32> to vector<16x128xf32>
    %148 = arith.mulf %146, %147 : vector<16x128xf32>
    %149 = vector.broadcast %10 : vector<1x128xf32> to vector<16x128xf32>
    %150 = arith.addf %148, %149 : vector<16x128xf32>
    %151 = arith.truncf %150 : vector<16x128xf32> to vector<16x128xbf16>
    %c4 = arith.constant 4 : index
    %c0_45 = arith.constant 0 : index
    %c0_46 = arith.constant 0 : index
    %152 = vector.load %arg3[%c4, %c0_45, %c0_46] : memref<6x128x128xbf16, #tpu.memory_space<vmem>>, vector<1x128x128xbf16>
    %153 = vector.shape_cast %152 : vector<1x128x128xbf16> to vector<128x128xbf16>
    %cst_47 = arith.constant dense<0.000000e+00> : vector<16x128xf32>
    %154 = tpu.matmul %151, %153, %cst_47 {dimension_numbers = #tpu.dot_dimension_numbers<[1], [0], [0], [1], [0, 0, 1, 1], [], []>} : vector<16x128xbf16>, vector<128x128xbf16>, vector<16x128xf32> -> vector<16x128xf32>
    %cst_48 = arith.constant 0.000000e+00 : f32
    %155 = vector.broadcast %cst_48 : f32 to vector<16x128xf32>
    %156 = arith.maximumf %154, %155 : vector<16x128xf32>
    %157 = arith.truncf %156 : vector<16x128xf32> to vector<16x128xbf16>
    %c5 = arith.constant 5 : index
    %c0_49 = arith.constant 0 : index
    %c0_50 = arith.constant 0 : index
    %158 = vector.load %arg3[%c5, %c0_49, %c0_50] : memref<6x128x128xbf16, #tpu.memory_space<vmem>>, vector<1x128x128xbf16>
    %159 = vector.shape_cast %158 : vector<1x128x128xbf16> to vector<128x128xbf16>
    %cst_51 = arith.constant dense<0.000000e+00> : vector<16x128xf32>
    %160 = tpu.matmul %157, %159, %cst_51 {dimension_numbers = #tpu.dot_dimension_numbers<[1], [0], [0], [1], [0, 0, 1, 1], [], []>} : vector<16x128xbf16>, vector<128x128xbf16>, vector<16x128xf32> -> vector<16x128xf32>
    %161 = arith.addf %160, %150 : vector<16x128xf32>
    %cst_52 = arith.constant dense<0.000000e+00> : vector<16xf32>
    %162 = vector.multi_reduction <add>, %161, %cst_52 [1] : vector<16x128xf32> to vector<16xf32>
    %163 = vector.shape_cast %162 : vector<16xf32> to vector<16x1xf32>
    %cst_53 = arith.constant 1.280000e+02 : f32
    %164 = vector.broadcast %cst_53 : f32 to vector<16x1xf32>
    %165 = arith.divf %163, %164 : vector<16x1xf32>
    %166 = arith.mulf %161, %161 : vector<16x128xf32>
    %cst_54 = arith.constant dense<0.000000e+00> : vector<16xf32>
    %167 = vector.multi_reduction <add>, %166, %cst_54 [1] : vector<16x128xf32> to vector<16xf32>
    %168 = vector.shape_cast %167 : vector<16xf32> to vector<16x1xf32>
    %cst_55 = arith.constant 1.280000e+02 : f32
    %169 = vector.broadcast %cst_55 : f32 to vector<16x1xf32>
    %170 = arith.divf %168, %169 : vector<16x1xf32>
    %171 = arith.mulf %165, %165 : vector<16x1xf32>
    %172 = arith.subf %170, %171 : vector<16x1xf32>
    %173 = vector.broadcast %165 : vector<16x1xf32> to vector<16x128xf32>
    %174 = arith.subf %161, %173 : vector<16x128xf32>
    %cst_56 = arith.constant 9.99999974E-6 : f32
    %175 = vector.broadcast %cst_56 : f32 to vector<16x1xf32>
    %176 = arith.addf %172, %175 : vector<16x1xf32>
    %177 = math.rsqrt %176 : vector<16x1xf32>
    %178 = vector.broadcast %177 : vector<16x1xf32> to vector<16x128xf32>
    %179 = arith.mulf %174, %178 : vector<16x128xf32>
    %180 = vector.broadcast %11 : vector<1x128xf32> to vector<16x128xf32>
    %181 = arith.mulf %179, %180 : vector<16x128xf32>
    %182 = vector.broadcast %12 : vector<1x128xf32> to vector<16x128xf32>
    %183 = arith.addf %181, %182 : vector<16x128xf32>
    %184 = vector.shape_cast %183 : vector<16x128xf32> to vector<2x8x128xf32>
    %c0_57 = arith.constant 0 : index
    %c0_58 = arith.constant 0 : index
    %c0_59 = arith.constant 0 : index
    %185 = vector.load %arg5[%c0_57, %c0_58, %c0_59] : memref<2x8x128xf32, #tpu.memory_space<vmem>>, vector<2x8x128xf32>
    tpu.vector_store %arg5[%c0_57, %c0_58, %c0_59], %184 {strides = array<i32>} : memref<2x8x128xf32, #tpu.memory_space<vmem>>, vector<2x8x128xf32>,
    return
  }
  func.func @transform_0(%arg0: i32) -> (i32, i32, i32) {
    %c0_i32 = arith.constant 0 : i32
    %c0_i32_0 = arith.constant 0 : i32
    %c0_i32_1 = arith.constant 0 : i32
    return %arg0, %c0_i32, %c0_i32_0 : i32, i32, i32
  }
  func.func @transform_1(%arg0: i32) -> (i32, i32, i32) {
    %c0_i32 = arith.constant 0 : i32
    %c0_i32_0 = arith.constant 0 : i32
    %c0_i32_1 = arith.constant 0 : i32
    return %arg0, %c0_i32, %c0_i32_0 : i32, i32, i32
  }
  func.func @transform_2(%arg0: i32) -> (i32, i32, i32) {
    %c0_i32 = arith.constant 0 : i32
    %c0_i32_0 = arith.constant 0 : i32
    %c0_i32_1 = arith.constant 0 : i32
    %c0_i32_2 = arith.constant 0 : i32
    return %c0_i32, %c0_i32_0, %c0_i32_1 : i32, i32, i32
  }
  func.func @transform_3(%arg0: i32) -> (i32, i32) {
    %c0_i32 = arith.constant 0 : i32
    %c0_i32_0 = arith.constant 0 : i32
    %c0_i32_1 = arith.constant 0 : i32
    return %c0_i32, %c0_i32_0 : i32, i32
  }
  func.func @transform_4(%arg0: i32) -> (i32, i32, i32) {
    %c0_i32 = arith.constant 0 : i32
    %c0_i32_0 = arith.constant 0 : i32
    %c0_i32_1 = arith.constant 0 : i32
    return %arg0, %c0_i32, %c0_i32_0 : i32, i32, i32
  }
}

</mosaic_0001>

<llo_original>
// kernel: tpu_custom_call.1
$region0: #{tpu_custom_call.1}
  #allocation0 [shape = 'u32[]', space=smem, size = 0x4, offset = 0x4, fixed_abs, tag = 'smem constant byte address 0x4 - core index']
  #allocation1 [shape = 'u32[144,128]{1,0:T(1,128)}', space=vmem, size = 0x12000, scoped, tag = 'internal scratch']
  %s0 = inlined_call_operand.hbm [shape: f32[2,8,128], index: 0, kind: input, shape index: {}]
  %s1 = inlined_call_operand.hbm [shape: f32[2,8,128], index: 1, kind: input, shape index: {}]
  %s2 = inlined_call_operand.hbm [shape: bf16[6,128,128], index: 2, kind: input, shape index: {}]
  %s3 = inlined_call_operand.hbm [shape: f32[8,128], index: 3, kind: input, shape index: {}]
  %s4 = inlined_call_operand.hbm [shape: f32[2,8,128], index: 4, kind: output, shape index: {}]
  %s5 = sld [smem:[#allocation0]]
  $region42: #{tpu_custom_call.1} parent=0
    _
  %s7 = ssub.s32 1, %s5
  %s8 = scalar_select 0, %s7, %s5
  $region1: #{tpu_custom_call.1} parent=0
    #allocation2 [shape = 'u8[8192]{0}', space=vmem, size = 0x2000, scoped, tag = 'input window, operand 0, single buffered']
    #allocation3 [shape = 's32[1]{0}', space=sflag, size = 0x4, scoped, tag = 'scoped memory for tpu_custom_call.1']
    #allocation4 [shape = 's32[1]{0}', space=sflag, size = 0x4, scoped, tag = 'scoped memory for tpu_custom_call.1']
    #allocation5 [shape = 'u8[8192]{0}', space=vmem, size = 0x2000, scoped, tag = 'input window, operand 1, single buffered']
    #allocation6 [shape = 's32[1]{0}', space=sflag, size = 0x4, scoped, tag = 'scoped memory for tpu_custom_call.1']
    #allocation7 [shape = 'u8[196608]{0}', space=vmem, size = 0x30000, scoped, tag = 'input window, operand 2, single buffered']
    #allocation8 [shape = 'u8[4096]{0}', space=vmem, size = 0x1000, scoped, tag = 'input window, operand 3, single buffered']
    #allocation9 [shape = 's32[1]{0}', space=sflag, size = 0x4, scoped, tag = 'scoped memory for tpu_custom_call.1']
    #allocation10 [shape = 'u8[8192]{0}', space=vmem, size = 0x2000, scoped, tag = 'output window, operand 0, single buffered']
    %9 = vsyncpa [#allocation3], 0
    %10 = vsyncpa [#allocation6], 0
    %11 = vsyncpa [#allocation9], 0
    %12 = vsyncpa [#allocation4], 0
    // Predicated region
    $region2: #{tpu_custom_call.1} parent=1 // pred_check
      _
    $region3: #{tpu_custom_call.1} parent=1 // pred_check_branch
      %14 = sbr.rel (0) target = $region5
    $region4: #{tpu_custom_call.1} parent=1 // pred_region
      %s16 = ssub.s32 256, 256
      %17 = vsyncadd [#allocation3], %s16
      %s18 = sshll.u32 [#allocation2], 4
      %s19 = int_to_ptr.vmem [resolvable:$true] %s18
      %24 = dma.hbm_to_vmem [thread:$0]  %s0, 256, %s19, [#allocation3], 128, 128, 8
    $region5: #{tpu_custom_call.1} parent=1 // pred_fallthru
      _
    // Predicated region
    $region6: #{tpu_custom_call.1} parent=1 // pred_check
      _
    $region7: #{tpu_custom_call.1} parent=1 // pred_check_branch
      %26 = sbr.rel (0) target = $region9
    $region8: #{tpu_custom_call.1} parent=1 // pred_region
      %s28 = ssub.s32 256, 256
      %29 = vsyncadd [#allocation6], %s28
      %s30 = sshll.u32 [#allocation5], 4
      %s31 = int_to_ptr.vmem [resolvable:$true] %s30
      %36 = dma.hbm_to_vmem [thread:$0]  %s1, 256, %s31, [#allocation6], 128, 128, 8
    $region9: #{tpu_custom_call.1} parent=1 // pred_fallthru
      _
    // Predicated region
    $region10: #{tpu_custom_call.1} parent=1 // pred_check
      _
    $region11: #{tpu_custom_call.1} parent=1 // pred_check_branch
      %38 = sbr.rel (0) target = $region13
    $region12: #{tpu_custom_call.1} parent=1 // pred_region
      %s40 = ssub.s32 6144, 6144
      %41 = vsyncadd [#allocation6], %s40
      %s42 = sshll.u32 [#allocation7], 4
      %s43 = int_to_ptr.vmem [resolvable:$true] %s42
      %48 = dma.hbm_to_vmem [thread:$0]  %s2, 6144, %s43, [#allocation6], 64, 64, 4
    $region13: #{tpu_custom_call.1} parent=1 // pred_fallthru
      _
    // Predicated region
    $region14: #{tpu_custom_call.1} parent=1 // pred_check
      _
    $region15: #{tpu_custom_call.1} parent=1 // pred_check_branch
      %50 = sbr.rel (0) target = $region17
    $region16: #{tpu_custom_call.1} parent=1 // pred_region
      %s52 = ssub.s32 128, 128
      %53 = vsyncadd [#allocation9], %s52
      %s55 = sshll.u32 [#allocation8], 4
      %s56 = int_to_ptr.vmem [resolvable:$true] %s55
      %58 = dma.hbm_to_vmem [thread:$0]  %s3, 128, %s56, [#allocation9]
    $region17: #{tpu_custom_call.1} parent=1 // pred_fallthru
      _
    // Predicated region
    $region18: #{tpu_custom_call.1} parent=1 // pred_check
      _
    $region19: #{tpu_custom_call.1} parent=1 // pred_check_branch
      %60 = sbr.rel (0) target = $region21
    $region20: #{tpu_custom_call.1} parent=1 // pred_region
      %61 = dma.done [#allocation3], 256
    $region21: #{tpu_custom_call.1} parent=1 // pred_fallthru
      _
    // Predicated region
    $region22: #{tpu_custom_call.1} parent=1 // pred_check
      _
    $region23: #{tpu_custom_call.1} parent=1 // pred_check_branch
      %63 = sbr.rel (0) target = $region25
    $region24: #{tpu_custom_call.1} parent=1 // pred_region
      %64 = dma.done [#allocation6], 256
    $region25: #{tpu_custom_call.1} parent=1 // pred_fallthru
      _
    // Predicated region
    $region26: #{tpu_custom_call.1} parent=1 // pred_check
      _
    $region27: #{tpu_custom_call.1} parent=1 // pred_check_branch
      %66 = sbr.rel (0) target = $region29
    $region28: #{tpu_custom_call.1} parent=1 // pred_region
      %67 = dma.done [#allocation6], 6144
    $region29: #{tpu_custom_call.1} parent=1 // pred_fallthru
      _
    // Predicated region
    $region30: #{tpu_custom_call.1} parent=1 // pred_check
      _
    $region31: #{tpu_custom_call.1} parent=1 // pred_check_branch
      %69 = sbr.rel (0) target = $region33
    $region32: #{tpu_custom_call.1} parent=1 // pred_region
      %70 = dma.done [#allocation9], 128
    $region33: #{tpu_custom_call.1} parent=1 // pred_fallthru
      _
    %v72 = vld [vmem:[#allocation2] sm:$0xff]
    %v73 = vld [vmem:[#allocation2 + $0x8] sm:$0xff]
    %v74 = vld [vmem:[#allocation5] sm:$0xff]
    %v75 = vld [vmem:[#allocation5 + $0x8] sm:$0xff]
    %v76 = vld [vmem:[#allocation8] sm:$0xff]
    %v77 = vadd.f32 %v72, %v74
    %v78 = vadd.f32 %v73, %v75
    %v79 = vpack.c.bf16 %v78, %v77
    %v80 = vpack.c.bf16 %v73, %v72
    %v81 = vld [vmem:[#allocation7] sm:$0xf]
    %v82 = vld [vmem:[#allocation7 + $0x4] sm:$0xf]
    %v83 = vld [vmem:[#allocation7 + $0x8] sm:$0xf]
    %v84 = vld [vmem:[#allocation7 + $0xc] sm:$0xf]
    %v85 = vld [vmem:[#allocation7 + $0x10] sm:$0xf]
    %v86 = vld [vmem:[#allocation7 + $0x14] sm:$0xf]
    %v87 = vld [vmem:[#allocation7 + $0x18] sm:$0xf]
    %v88 = vld [vmem:[#allocation7 + $0x1c] sm:$0xf]
    %v89 = vld [vmem:[#allocation7 + $0x20] sm:$0xf]
    %v90 = vld [vmem:[#allocation7 + $0x24] sm:$0xf]
    %v91 = vld [vmem:[#allocation7 + $0x28] sm:$0xf]
    %v92 = vld [vmem:[#allocation7 + $0x2c] sm:$0xf]
    %v93 = vld [vmem:[#allocation7 + $0x30] sm:$0xf]
    %v94 = vld [vmem:[#allocation7 + $0x34] sm:$0xf]
    %v95 = vld [vmem:[#allocation7 + $0x38] sm:$0xf]
    %v96 = vld [vmem:[#allocation7 + $0x3c] sm:$0xf]
    %v97 = vlaneseq
    %v98 = vshrl.u32 %v97, 7
    %v99 = vsub.s32 0, %v98
    %v100 = vrot.slane %v76, %v99
    %v117 = vunpack.c.l.b16 %v81
    %v118 = vunpack.c.l.b16 %v82
    %v119 = vunpack.c.l.b16 %v83
    %v120 = vunpack.c.l.b16 %v84
    %v121 = vunpack.c.l.b16 %v85
    %v122 = vunpack.c.l.b16 %v86
    %v123 = vunpack.c.l.b16 %v87
    %v124 = vunpack.c.l.b16 %v88
    %v125 = vunpack.c.l.b16 %v89
    %v126 = vunpack.c.l.b16 %v90
    %v127 = vunpack.c.l.b16 %v91
    %v128 = vunpack.c.l.b16 %v92
    %v129 = vunpack.c.l.b16 %v93
    %v130 = vunpack.c.l.b16 %v94
    %v131 = vunpack.c.l.b16 %v95
    %v132 = vunpack.c.l.b16 %v96
    %v133 = vpack.c.b16 %v118, %v117
    %v134 = vpack.c.b16 %v120, %v119
    %v135 = vpack.c.b16 %v122, %v121
    %v136 = vpack.c.b16 %v124, %v123
    %v137 = vpack.c.b16 %v126, %v125
    %v138 = vpack.c.b16 %v128, %v127
    %v139 = vpack.c.b16 %v130, %v129
    %v140 = vpack.c.b16 %v132, %v131
    %149 = vmatprep.subr.bf16.mxu0 0
    %150 = vmatpush1.bf16.msra.mxu0 %v140
    %151 = vmatprep.subr.bf16.mxu0 0
    %152 = vmatpush1.bf16.msra.mxu0 %v139
    %153 = vmatprep.subr.bf16.mxu0 0
    %154 = vmatpush1.bf16.msra.mxu0 %v138
    %155 = vmatprep.subr.bf16.mxu0 0
    %156 = vmatpush1.bf16.msra.mxu0 %v137
    %157 = vmatprep.subr.bf16.mxu0 0
    %158 = vmatpush1.bf16.msra.mxu0 %v136
    %159 = vmatprep.subr.bf16.mxu0 0
    %160 = vmatpush1.bf16.msra.mxu0 %v135
    %161 = vmatprep.subr.bf16.mxu0 0
    %162 = vmatpush1.bf16.msra.mxu0 %v134
    %163 = vmatprep.subr.bf16.mxu0 0
    %164 = vmatpush1.bf16.msra.mxu0 %v133
    %165 = vmatprep.subr.bf16.mxu0 0
    %166 = vmatpush2.bf16.msra.mxu0 0
    %167 = vmatprep.subr.bf16.mxu0 0
    %168 = vmatpush2.bf16.msra.mxu0 0
    %169 = vmatprep.subr.bf16.mxu0 0
    %170 = vmatpush2.bf16.msra.mxu0 0
    %171 = vmatprep.subr.bf16.mxu0 0
    %172 = vmatpush2.bf16.msra.mxu0 0
    %173 = vmatprep.subr.bf16.mxu0 0
    %174 = vmatpush2.bf16.msra.mxu0 0
    %175 = vmatprep.subr.bf16.mxu0 0
    %176 = vmatpush2.bf16.msra.mxu0 0
    %177 = vmatprep.subr.bf16.mxu0 0
    %178 = vmatpush2.bf16.msra.mxu0 0
    %179 = vmatprep.subr.bf16.mxu0 0
    %180 = vmatpush2.bf16.msra.mxu0 0
    %181 = vmatprep.mubr.bf16.mxu0 0
    %182 = vmatmul.mubr.bf16.gmra.mxu0 %v79
    %v183 = vpop.f32.mrf.mxu0
    %v184 = vadd.f32 %v100, %v183
    %v185 = vpop.f32.mrf.mxu0
    %v186 = vpop.f32.mrf.mxu0
    %v187 = vadd.f32 %v100, %v186
    %v188 = vpop.f32.mrf.mxu0
    %189 = vdwg.mxu0
    %s190 = scalar_lea.vmem [#allocation7], 64
    %v191 = vld [vmem:[%s190] sm:$0xf]
    %v192 = vld [vmem:[%s190 + $0x4] sm:$0xf]
    %v193 = vld [vmem:[%s190 + $0x8] sm:$0xf]
    %v194 = vld [vmem:[%s190 + $0xc] sm:$0xf]
    %v195 = vld [vmem:[%s190 + $0x10] sm:$0xf]
    %v196 = vld [vmem:[%s190 + $0x14] sm:$0xf]
    %v197 = vld [vmem:[%s190 + $0x18] sm:$0xf]
    %v198 = vld [vmem:[%s190 + $0x1c] sm:$0xf]
    %v199 = vld [vmem:[%s190 + $0x20] sm:$0xf]
    %v200 = vld [vmem:[%s190 + $0x24] sm:$0xf]
    %v201 = vld [vmem:[%s190 + $0x28] sm:$0xf]
    %v202 = vld [vmem:[%s190 + $0x2c] sm:$0xf]
    %v203 = vld [vmem:[%s190 + $0x30] sm:$0xf]
    %v204 = vld [vmem:[%s190 + $0x34] sm:$0xf]
    %v205 = vld [vmem:[%s190 + $0x38] sm:$0xf]
    %v206 = vld [vmem:[%s190 + $0x3c] sm:$0xf]
    %v207 = vlaneseq
    %v208 = vshrl.u32 %v207, 7
    %v209 = vsub.s32 1, %v208
    %v210 = vrot.slane %v76, %v209
    %v227 = vunpack.c.l.b16 %v191
    %v228 = vunpack.c.l.b16 %v192
    %v229 = vunpack.c.l.b16 %v193
    %v230 = vunpack.c.l.b16 %v194
    %v231 = vunpack.c.l.b16 %v195
    %v232 = vunpack.c.l.b16 %v196
    %v233 = vunpack.c.l.b16 %v197
    %v234 = vunpack.c.l.b16 %v198
    %v235 = vunpack.c.l.b16 %v199
    %v236 = vunpack.c.l.b16 %v200
    %v237 = vunpack.c.l.b16 %v201
    %v238 = vunpack.c.l.b16 %v202
    %v239 = vunpack.c.l.b16 %v203
    %v240 = vunpack.c.l.b16 %v204
    %v241 = vunpack.c.l.b16 %v205
    %v242 = vunpack.c.l.b16 %v206
    %v243 = vpack.c.b16 %v228, %v227
    %v244 = vpack.c.b16 %v230, %v229
    %v245 = vpack.c.b16 %v232, %v231
    %v246 = vpack.c.b16 %v234, %v233
    %v247 = vpack.c.b16 %v236, %v235
    %v248 = vpack.c.b16 %v238, %v237
    %v249 = vpack.c.b16 %v240, %v239
    %v250 = vpack.c.b16 %v242, %v241
    %259 = vmatprep.subr.bf16.mxu0 0
    %260 = vmatpush1.bf16.msra.mxu0 %v250
    %261 = vmatprep.subr.bf16.mxu0 0
    %262 = vmatpush1.bf16.msra.mxu0 %v249
    %263 = vmatprep.subr.bf16.mxu0 0
    %264 = vmatpush1.bf16.msra.mxu0 %v248
    %265 = vmatprep.subr.bf16.mxu0 0
    %266 = vmatpush1.bf16.msra.mxu0 %v247
    %267 = vmatprep.subr.bf16.mxu0 0
    %268 = vmatpush1.bf16.msra.mxu0 %v246
    %269 = vmatprep.subr.bf16.mxu0 0
    %270 = vmatpush1.bf16.msra.mxu0 %v245
    %271 = vmatprep.subr.bf16.mxu0 0
    %272 = vmatpush1.bf16.msra.mxu0 %v244
    %273 = vmatprep.subr.bf16.mxu0 0
    %274 = vmatpush1.bf16.msra.mxu0 %v243
    %275 = vmatprep.subr.bf16.mxu0 0
    %276 = vmatpush2.bf16.msra.mxu0 0
    %277 = vmatprep.subr.bf16.mxu0 0
    %278 = vmatpush2.bf16.msra.mxu0 0
    %279 = vmatprep.subr.bf16.mxu0 0
    %280 = vmatpush2.bf16.msra.mxu0 0
    %281 = vmatprep.subr.bf16.mxu0 0
    %282 = vmatpush2.bf16.msra.mxu0 0
    %283 = vmatprep.subr.bf16.mxu0 0
    %284 = vmatpush2.bf16.msra.mxu0 0
    %285 = vmatprep.subr.bf16.mxu0 0
    %286 = vmatpush2.bf16.msra.mxu0 0
    %287 = vmatprep.subr.bf16.mxu0 0
    %288 = vmatpush2.bf16.msra.mxu0 0
    %289 = vmatprep.subr.bf16.mxu0 0
    %290 = vmatpush2.bf16.msra.mxu0 0
    %291 = vmatprep.mubr.bf16.mxu0 0
    %292 = vmatmul.mubr.bf16.gmra.mxu0 %v79
    %v293 = vpop.f32.mrf.mxu0
    %v294 = vadd.f32 %v210, %v293
    %v295 = vpop.f32.mrf.mxu0
    %v296 = vpop.f32.mrf.mxu0
    %v297 = vadd.f32 %v210, %v296
    %v298 = vpop.f32.mrf.mxu0
    %299 = vdwg.mxu0
    %s300 = scalar_lea.vmem [#allocation7], 128
    %v301 = vld [vmem:[%s300] sm:$0xf]
    %v302 = vld [vmem:[%s300 + $0x4] sm:$0xf]
    %v303 = vld [vmem:[%s300 + $0x8] sm:$0xf]
    %v304 = vld [vmem:[%s300 + $0xc] sm:$0xf]
    %v305 = vld [vmem:[%s300 + $0x10] sm:$0xf]
    %v306 = vld [vmem:[%s300 + $0x14] sm:$0xf]
    %v307 = vld [vmem:[%s300 + $0x18] sm:$0xf]
    %v308 = vld [vmem:[%s300 + $0x1c] sm:$0xf]
    %v309 = vld [vmem:[%s300 + $0x20] sm:$0xf]
    %v310 = vld [vmem:[%s300 + $0x24] sm:$0xf]
    %v311 = vld [vmem:[%s300 + $0x28] sm:$0xf]
    %v312 = vld [vmem:[%s300 + $0x2c] sm:$0xf]
    %v313 = vld [vmem:[%s300 + $0x30] sm:$0xf]
    %v314 = vld [vmem:[%s300 + $0x34] sm:$0xf]
    %v315 = vld [vmem:[%s300 + $0x38] sm:$0xf]
    %v316 = vld [vmem:[%s300 + $0x3c] sm:$0xf]
    %v317 = vlaneseq
    %v318 = vshrl.u32 %v317, 7
    %v319 = vsub.s32 2, %v318
    %v320 = vrot.slane %v76, %v319
    %v337 = vunpack.c.l.b16 %v301
    %v338 = vunpack.c.l.b16 %v302
    %v339 = vunpack.c.l.b16 %v303
    %v340 = vunpack.c.l.b16 %v304
    %v341 = vunpack.c.l.b16 %v305
    %v342 = vunpack.c.l.b16 %v306
    %v343 = vunpack.c.l.b16 %v307
    %v344 = vunpack.c.l.b16 %v308
    %v345 = vunpack.c.l.b16 %v309
    %v346 = vunpack.c.l.b16 %v310
    %v347 = vunpack.c.l.b16 %v311
    %v348 = vunpack.c.l.b16 %v312
    %v349 = vunpack.c.l.b16 %v313
    %v350 = vunpack.c.l.b16 %v314
    %v351 = vunpack.c.l.b16 %v315
    %v352 = vunpack.c.l.b16 %v316
    %v353 = vpack.c.b16 %v338, %v337
    %v354 = vpack.c.b16 %v340, %v339
    %v355 = vpack.c.b16 %v342, %v341
    %v356 = vpack.c.b16 %v344, %v343
    %v357 = vpack.c.b16 %v346, %v345
    %v358 = vpack.c.b16 %v348, %v347
    %v359 = vpack.c.b16 %v350, %v349
    %v360 = vpack.c.b16 %v352, %v351
    %369 = vmatprep.subr.bf16.mxu0 0
    %370 = vmatpush1.bf16.msra.mxu0 %v360
    %371 = vmatprep.subr.bf16.mxu0 0
    %372 = vmatpush1.bf16.msra.mxu0 %v359
    %373 = vmatprep.subr.bf16.mxu0 0
    %374 = vmatpush1.bf16.msra.mxu0 %v358
    %375 = vmatprep.subr.bf16.mxu0 0
    %376 = vmatpush1.bf16.msra.mxu0 %v357
    %377 = vmatprep.subr.bf16.mxu0 0
    %378 = vmatpush1.bf16.msra.mxu0 %v356
    %379 = vmatprep.subr.bf16.mxu0 0
    %380 = vmatpush1.bf16.msra.mxu0 %v355
    %381 = vmatprep.subr.bf16.mxu0 0
    %382 = vmatpush1.bf16.msra.mxu0 %v354
    %383 = vmatprep.subr.bf16.mxu0 0
    %384 = vmatpush1.bf16.msra.mxu0 %v353
    %385 = vmatprep.subr.bf16.mxu0 0
    %386 = vmatpush2.bf16.msra.mxu0 0
    %387 = vmatprep.subr.bf16.mxu0 0
    %388 = vmatpush2.bf16.msra.mxu0 0
    %389 = vmatprep.subr.bf16.mxu0 0
    %390 = vmatpush2.bf16.msra.mxu0 0
    %391 = vmatprep.subr.bf16.mxu0 0
    %392 = vmatpush2.bf16.msra.mxu0 0
    %393 = vmatprep.subr.bf16.mxu0 0
    %394 = vmatpush2.bf16.msra.mxu0 0
    %395 = vmatprep.subr.bf16.mxu0 0
    %396 = vmatpush2.bf16.msra.mxu0 0
    %397 = vmatprep.subr.bf16.mxu0 0
    %398 = vmatpush2.bf16.msra.mxu0 0
    %399 = vmatprep.subr.bf16.mxu0 0
    %400 = vmatpush2.bf16.msra.mxu0 0
    %401 = vmatprep.mubr.bf16.mxu0 0
    %402 = vmatmul.mubr.bf16.gmra.mxu0 %v80
    %v403 = vpop.f32.mrf.mxu0
    %v404 = vadd.f32 %v320, %v403
    %v405 = vpop.f32.mrf.mxu0
    %v406 = vpop.f32.mrf.mxu0
    %v407 = vadd.f32 %v320, %v406
    %v408 = vpop.f32.mrf.mxu0
    %409 = vdwg.mxu0
    %v410 = vmul.f32 %v184, 0.17677669
    %v411 = vmul.f32 %v187, 0.17677669
    %v412 = vpack.c.bf16 %v411, %v410
    %v414 = vunpack.c.l.b16 %v412
    %v415 = vunpack.c.h.b16 %v412
    %v416 = vpack.c.b16 %v414, %v414
    %v417 = vpack.c.b16 %v415, %v415
    %v418 = vpack.c.bf16 %v297, %v294
    %v420 = vunpack.c.l.b16 %v418
    %v421 = vunpack.c.h.b16 %v418
    %v422 = vpack.c.b16 %v420, %v420
    %v423 = vpack.c.b16 %v421, %v421
    %v424 = vpack.c.bf16 %v407, %v404
    %v426 = vunpack.c.l.b16 %v424
    %v427 = vunpack.c.h.b16 %v424
    %v428 = vpack.c.b16 %v426, %v426
    %v429 = vpack.c.b16 %v427, %v427
    %s430 = scalar_lea.vmem [#allocation7], 192
    %v431 = vld [vmem:[%s430] sm:$0xf]
    %v432 = vld [vmem:[%s430 + $0x4] sm:$0xf]
    %v433 = vld [vmem:[%s430 + $0x8] sm:$0xf]
    %v434 = vld [vmem:[%s430 + $0xc] sm:$0xf]
    %v435 = vld [vmem:[%s430 + $0x10] sm:$0xf]
    %v436 = vld [vmem:[%s430 + $0x14] sm:$0xf]
    %v437 = vld [vmem:[%s430 + $0x18] sm:$0xf]
    %v438 = vld [vmem:[%s430 + $0x1c] sm:$0xf]
    %v439 = vld [vmem:[%s430 + $0x20] sm:$0xf]
    %v440 = vld [vmem:[%s430 + $0x24] sm:$0xf]
    %v441 = vld [vmem:[%s430 + $0x28] sm:$0xf]
    %v442 = vld [vmem:[%s430 + $0x2c] sm:$0xf]
    %v443 = vld [vmem:[%s430 + $0x30] sm:$0xf]
    %v444 = vld [vmem:[%s430 + $0x34] sm:$0xf]
    %v445 = vld [vmem:[%s430 + $0x38] sm:$0xf]
    %v446 = vld [vmem:[%s430 + $0x3c] sm:$0xf]
    %vm447 = vcmask 261120
    %v449 = vsel %vm447, %v416, 0
    %v452 = vsel %vm447, %v422, 0
    %454 = vmatprep.subr.bf16.mxu0 0
    %455 = vmatpush1.bf16.xpose.msra.mxu0 0
    %456 = vmatprep.subr.bf16.mxu0 0
    %457 = vmatpush1.bf16.xpose.msra.mxu0 0
    %458 = vmatprep.subr.bf16.mxu0 0
    %459 = vmatpush1.bf16.xpose.msra.mxu0 0
    %460 = vmatprep.subr.bf16.mxu0 0
    %461 = vmatpush1.bf16.xpose.msra.mxu0 0
    %462 = vmatprep.subr.bf16.mxu0 0
    %463 = vmatpush1.bf16.xpose.msra.mxu0 0
    %464 = vmatprep.subr.bf16.mxu0 0
    %465 = vmatpush1.bf16.xpose.msra.mxu0 0
    %466 = vmatprep.subr.bf16.mxu0 0
    %467 = vmatpush1.bf16.xpose.msra.mxu0 0
    %468 = vmatprep.subr.bf16.mxu0 0
    %469 = vmatpush1.bf16.xpose.msra.mxu0 %v452
    %470 = vmatprep.subr.bf16.mxu0 0
    %471 = vmatpush2.bf16.xpose.msra.mxu0 0
    %472 = vmatprep.subr.bf16.mxu0 0
    %473 = vmatpush2.bf16.xpose.msra.mxu0 0
    %474 = vmatprep.subr.bf16.mxu0 0
    %475 = vmatpush2.bf16.xpose.msra.mxu0 0
    %476 = vmatprep.subr.bf16.mxu0 0
    %477 = vmatpush2.bf16.xpose.msra.mxu0 0
    %478 = vmatprep.subr.bf16.mxu0 0
    %479 = vmatpush2.bf16.xpose.msra.mxu0 0
    %480 = vmatprep.subr.bf16.mxu0 0
    %481 = vmatpush2.bf16.xpose.msra.mxu0 0
    %482 = vmatprep.subr.bf16.mxu0 0
    %483 = vmatpush2.bf16.xpose.msra.mxu0 0
    %484 = vmatprep.subr.bf16.mxu0 0
    %485 = vmatpush2.bf16.xpose.msra.mxu0 0
    %486 = vmatprep.mubr.bf16.mxu0 0
    %487 = vmatmul.mubr.bf16.gmra.mxu0 %v449
    %v488 = vpop.f32.mrf.mxu0
    %v489 = vadd.f32 0.0, %v488
    %v490 = vpop.f32.mrf.mxu0
    %v491 = vpop.f32.mrf.mxu0
    %v492 = vpop.f32.mrf.mxu0
    %493 = vdwg.mxu0
    %v495 = vsel %vm447, %v417, 0
    %v498 = vsel %vm447, %v423, 0
    %500 = vmatprep.subr.bf16.mxu0 0
    %501 = vmatpush1.bf16.xpose.msra.mxu0 0
    %502 = vmatprep.subr.bf16.mxu0 0
    %503 = vmatpush1.bf16.xpose.msra.mxu0 0
    %504 = vmatprep.subr.bf16.mxu0 0
    %505 = vmatpush1.bf16.xpose.msra.mxu0 0
    %506 = vmatprep.subr.bf16.mxu0 0
    %507 = vmatpush1.bf16.xpose.msra.mxu0 0
    %508 = vmatprep.subr.bf16.mxu0 0
    %509 = vmatpush1.bf16.xpose.msra.mxu0 0
    %510 = vmatprep.subr.bf16.mxu0 0
    %511 = vmatpush1.bf16.xpose.msra.mxu0 0
    %512 = vmatprep.subr.bf16.mxu0 0
    %513 = vmatpush1.bf16.xpose.msra.mxu0 0
    %514 = vmatprep.subr.bf16.mxu0 0
    %515 = vmatpush1.bf16.xpose.msra.mxu0 %v498
    %516 = vmatprep.subr.bf16.mxu0 0
    %517 = vmatpush2.bf16.xpose.msra.mxu0 0
    %518 = vmatprep.subr.bf16.mxu0 0
    %519 = vmatpush2.bf16.xpose.msra.mxu0 0
    %520 = vmatprep.subr.bf16.mxu0 0
    %521 = vmatpush2.bf16.xpose.msra.mxu0 0
    %522 = vmatprep.subr.bf16.mxu0 0
    %523 = vmatpush2.bf16.xpose.msra.mxu0 0
    %524 = vmatprep.subr.bf16.mxu0 0
    %525 = vmatpush2.bf16.xpose.msra.mxu0 0
    %526 = vmatprep.subr.bf16.mxu0 0
    %527 = vmatpush2.bf16.xpose.msra.mxu0 0
    %528 = vmatprep.subr.bf16.mxu0 0
    %529 = vmatpush2.bf16.xpose.msra.mxu0 0
    %530 = vmatprep.subr.bf16.mxu0 0
    %531 = vmatpush2.bf16.xpose.msra.mxu0 0
    %532 = vmatprep.mubr.bf16.mxu0 0
    %533 = vmatmul.mubr.bf16.gmra.mxu0 %v495
    %v534 = vpop.f32.mrf.mxu0
    %v535 = vadd.f32 0.0, %v534
    %v536 = vpop.f32.mrf.mxu0
    %v537 = vpop.f32.mrf.mxu0
    %v538 = vpop.f32.mrf.mxu0
    %539 = vdwg.mxu0
    %vm540 = vcmask 64512
    %v541 = vsel %vm540, %v489, -inf
    %542 = vmax.xlane.f32.xlu0 %v541
    %v543 = vpop.xlane.xlu0 %542
    %v544 = vsel %vm540, %v535, -inf
    %545 = vmax.xlane.f32.xlu0 %v544
    %v546 = vpop.xlane.xlu0 %545
    %v547 = vsub.f32 %v489, %v543
    %v548 = vsub.f32 %v535, %v546
    %v549 = vmul.f32 %v547, 1.442695
    %v550 = vpow.pop %v549
    %v551 = vmul.f32 %v548, 1.442695
    %v552 = vpow.pop %v551
    %v553 = vsel %vm540, %v550, 0.0
    %554 = vadd.xlane.f32.xlu0 %v553
    %v555 = vpop.xlane.xlu0 %554
    %v556 = vsel %vm540, %v552, 0.0
    %557 = vadd.xlane.f32.xlu0 %v556
    %v558 = vpop.xlane.xlu0 %557
    %v559 = vrcp.pop %v555
    %v560 = vrcp.pop %v558
    %v561 = vmul.f32 %v550, %v559
    %v562 = vmul.f32 %v552, %v560
    %v563 = vpack.c.bf16 %v561, %v561
    %v564 = vpack.c.bf16 %v562, %v562
    %v566 = vsel %vm540, %v563, 0
    %vm568 = vcmask 1043456
    %v570 = vsel %vm568, %v428, 0
    %572 = vmatprep.subr.bf16.mxu0 0
    %573 = vmatpush1.bf16.msra.mxu0 0
    %574 = vmatprep.subr.bf16.mxu0 0
    %575 = vmatpush1.bf16.msra.mxu0 0
    %576 = vmatprep.subr.bf16.mxu0 0
    %577 = vmatpush1.bf16.msra.mxu0 0
    %578 = vmatprep.subr.bf16.mxu0 0
    %579 = vmatpush1.bf16.msra.mxu0 0
    %580 = vmatprep.subr.bf16.mxu0 0
    %581 = vmatpush1.bf16.msra.mxu0 0
    %582 = vmatprep.subr.bf16.mxu0 0
    %583 = vmatpush1.bf16.msra.mxu0 0
    %584 = vmatprep.subr.bf16.mxu0 0
    %585 = vmatpush1.bf16.msra.mxu0 0
    %586 = vmatprep.subr.bf16.mxu0 0
    %587 = vmatpush1.bf16.msra.mxu0 %v570
    %588 = vmatprep.subr.bf16.mxu0 0
    %589 = vmatpush2.bf16.msra.mxu0 0
    %590 = vmatprep.subr.bf16.mxu0 0
    %591 = vmatpush2.bf16.msra.mxu0 0
    %592 = vmatprep.subr.bf16.mxu0 0
    %593 = vmatpush2.bf16.msra.mxu0 0
    %594 = vmatprep.subr.bf16.mxu0 0
    %595 = vmatpush2.bf16.msra.mxu0 0
    %596 = vmatprep.subr.bf16.mxu0 0
    %597 = vmatpush2.bf16.msra.mxu0 0
    %598 = vmatprep.subr.bf16.mxu0 0
    %599 = vmatpush2.bf16.msra.mxu0 0
    %600 = vmatprep.subr.bf16.mxu0 0
    %601 = vmatpush2.bf16.msra.mxu0 0
    %602 = vmatprep.subr.bf16.mxu0 0
    %603 = vmatpush2.bf16.msra.mxu0 0
    %604 = vmatprep.mubr.bf16.mxu0 0
    %605 = vmatmul.mubr.bf16.gmra.mxu0 %v566
    %v606 = vpop.f32.mrf.mxu0
    %v607 = vadd.f32 0.0, %v606
    %v608 = vpop.f32.mrf.mxu0
    %v609 = vpop.f32.mrf.mxu0
    %v610 = vpop.f32.mrf.mxu0
    %611 = vdwg.mxu0
    %v613 = vsel %vm540, %v564, 0
    %v616 = vsel %vm568, %v429, 0
    %618 = vmatprep.subr.bf16.mxu0 0
    %619 = vmatpush1.bf16.msra.mxu0 0
    %620 = vmatprep.subr.bf16.mxu0 0
    %621 = vmatpush1.bf16.msra.mxu0 0
    %622 = vmatprep.subr.bf16.mxu0 0
    %623 = vmatpush1.bf16.msra.mxu0 0
    %624 = vmatprep.subr.bf16.mxu0 0
    %625 = vmatpush1.bf16.msra.mxu0 0
    %626 = vmatprep.subr.bf16.mxu0 0
    %627 = vmatpush1.bf16.msra.mxu0 0
    %628 = vmatprep.subr.bf16.mxu0 0
    %629 = vmatpush1.bf16.msra.mxu0 0
    %630 = vmatprep.subr.bf16.mxu0 0
    %631 = vmatpush1.bf16.msra.mxu0 0
    %632 = vmatprep.subr.bf16.mxu0 0
    %633 = vmatpush1.bf16.msra.mxu0 %v616
    %634 = vmatprep.subr.bf16.mxu0 0
    %635 = vmatpush2.bf16.msra.mxu0 0
    %636 = vmatprep.subr.bf16.mxu0 0
    %637 = vmatpush2.bf16.msra.mxu0 0
    %638 = vmatprep.subr.bf16.mxu0 0
    %639 = vmatpush2.bf16.msra.mxu0 0
    %640 = vmatprep.subr.bf16.mxu0 0
    %641 = vmatpush2.bf16.msra.mxu0 0
    %642 = vmatprep.subr.bf16.mxu0 0
    %643 = vmatpush2.bf16.msra.mxu0 0
    %644 = vmatprep.subr.bf16.mxu0 0
    %645 = vmatpush2.bf16.msra.mxu0 0
    %646 = vmatprep.subr.bf16.mxu0 0
    %647 = vmatpush2.bf16.msra.mxu0 0
    %648 = vmatprep.subr.bf16.mxu0 0
    %649 = vmatpush2.bf16.msra.mxu0 0
    %650 = vmatprep.mubr.bf16.mxu0 0
    %651 = vmatmul.mubr.bf16.gmra.mxu0 %v613
    %v652 = vpop.f32.mrf.mxu0
    %v653 = vadd.f32 0.0, %v652
    %v654 = vpop.f32.mrf.mxu0
    %v655 = vpop.f32.mrf.mxu0
    %v656 = vpop.f32.mrf.mxu0
    %657 = vdwg.mxu0
    %v658 = vpack.c.bf16 %v653, %v607
    %659 = vrot.lane.b32.xlu0 %v416, 96
    %v660 = vpop.permute.xlu0 %659
    %661 = vrot.lane.b32.xlu0 %v422, 96
    %v662 = vpop.permute.xlu0 %661
    %v664 = vsel %vm447, %v660, 0
    %v667 = vsel %vm447, %v662, 0
    %669 = vmatprep.subr.bf16.mxu0 0
    %670 = vmatpush1.bf16.xpose.msra.mxu0 0
    %671 = vmatprep.subr.bf16.mxu0 0
    %672 = vmatpush1.bf16.xpose.msra.mxu0 0
    %673 = vmatprep.subr.bf16.mxu0 0
    %674 = vmatpush1.bf16.xpose.msra.mxu0 0
    %675 = vmatprep.subr.bf16.mxu0 0
    %676 = vmatpush1.bf16.xpose.msra.mxu0 0
    %677 = vmatprep.subr.bf16.mxu0 0
    %678 = vmatpush1.bf16.xpose.msra.mxu0 0
    %679 = vmatprep.subr.bf16.mxu0 0
    %680 = vmatpush1.bf16.xpose.msra.mxu0 0
    %681 = vmatprep.subr.bf16.mxu0 0
    %682 = vmatpush1.bf16.xpose.msra.mxu0 0
    %683 = vmatprep.subr.bf16.mxu0 0
    %684 = vmatpush1.bf16.xpose.msra.mxu0 %v667
    %685 = vmatprep.subr.bf16.mxu0 0
    %686 = vmatpush2.bf16.xpose.msra.mxu0 0
    %687 = vmatprep.subr.bf16.mxu0 0
    %688 = vmatpush2.bf16.xpose.msra.mxu0 0
    %689 = vmatprep.subr.bf16.mxu0 0
    %690 = vmatpush2.bf16.xpose.msra.mxu0 0
    %691 = vmatprep.subr.bf16.mxu0 0
    %692 = vmatpush2.bf16.xpose.msra.mxu0 0
    %693 = vmatprep.subr.bf16.mxu0 0
    %694 = vmatpush2.bf16.xpose.msra.mxu0 0
    %695 = vmatprep.subr.bf16.mxu0 0
    %696 = vmatpush2.bf16.xpose.msra.mxu0 0
    %697 = vmatprep.subr.bf16.mxu0 0
    %698 = vmatpush2.bf16.xpose.msra.mxu0 0
    %699 = vmatprep.subr.bf16.mxu0 0
    %700 = vmatpush2.bf16.xpose.msra.mxu0 0
    %701 = vmatprep.mubr.bf16.mxu0 0
    %702 = vmatmul.mubr.bf16.gmra.mxu0 %v664
    %v703 = vpop.f32.mrf.mxu0
    %v704 = vadd.f32 0.0, %v703
    %v705 = vpop.f32.mrf.mxu0
    %v706 = vpop.f32.mrf.mxu0
    %v707 = vpop.f32.mrf.mxu0
    %708 = vdwg.mxu0
    %709 = vrot.lane.b32.xlu0 %v417, 96
    %v710 = vpop.permute.xlu0 %709
    %711 = vrot.lane.b32.xlu0 %v423, 96
    %v712 = vpop.permute.xlu0 %711
    %v714 = vsel %vm447, %v710, 0
    %v717 = vsel %vm447, %v712, 0
    %719 = vmatprep.subr.bf16.mxu0 0
    %720 = vmatpush1.bf16.xpose.msra.mxu0 0
    %721 = vmatprep.subr.bf16.mxu0 0
    %722 = vmatpush1.bf16.xpose.msra.mxu0 0
    %723 = vmatprep.subr.bf16.mxu0 0
    %724 = vmatpush1.bf16.xpose.msra.mxu0 0
    %725 = vmatprep.subr.bf16.mxu0 0
    %726 = vmatpush1.bf16.xpose.msra.mxu0 0
    %727 = vmatprep.subr.bf16.mxu0 0
    %728 = vmatpush1.bf16.xpose.msra.mxu0 0
    %729 = vmatprep.subr.bf16.mxu0 0
    %730 = vmatpush1.bf16.xpose.msra.mxu0 0
    %731 = vmatprep.subr.bf16.mxu0 0
    %732 = vmatpush1.bf16.xpose.msra.mxu0 0
    %733 = vmatprep.subr.bf16.mxu0 0
    %734 = vmatpush1.bf16.xpose.msra.mxu0 %v717
    %735 = vmatprep.subr.bf16.mxu0 0
    %736 = vmatpush2.bf16.xpose.msra.mxu0 0
    %737 = vmatprep.subr.bf16.mxu0 0
    %738 = vmatpush2.bf16.xpose.msra.mxu0 0
    %739 = vmatprep.subr.bf16.mxu0 0
    %740 = vmatpush2.bf16.xpose.msra.mxu0 0
    %741 = vmatprep.subr.bf16.mxu0 0
    %742 = vmatpush2.bf16.xpose.msra.mxu0 0
    %743 = vmatprep.subr.bf16.mxu0 0
    %744 = vmatpush2.bf16.xpose.msra.mxu0 0
    %745 = vmatprep.subr.bf16.mxu0 0
    %746 = vmatpush2.bf16.xpose.msra.mxu0 0
    %747 = vmatprep.subr.bf16.mxu0 0
    %748 = vmatpush2.bf16.xpose.msra.mxu0 0
    %749 = vmatprep.subr.bf16.mxu0 0
    %750 = vmatpush2.bf16.xpose.msra.mxu0 0
    %751 = vmatprep.mubr.bf16.mxu0 0
    %752 = vmatmul.mubr.bf16.gmra.mxu0 %v714
    %v753 = vpop.f32.mrf.mxu0
    %v754 = vadd.f32 0.0, %v753
    %v755 = vpop.f32.mrf.mxu0
    %v756 = vpop.f32.mrf.mxu0
    %v757 = vpop.f32.mrf.mxu0
    %758 = vdwg.mxu0
    %v759 = vsel %vm540, %v704, -inf
    %760 = vmax.xlane.f32.xlu0 %v759
    %v761 = vpop.xlane.xlu0 %760
    %v762 = vsel %vm540, %v754, -inf
    %763 = vmax.xlane.f32.xlu0 %v762
    %v764 = vpop.xlane.xlu0 %763
    %v765 = vsub.f32 %v704, %v761
    %v766 = vsub.f32 %v754, %v764
    %v767 = vmul.f32 %v765, 1.442695
    %v768 = vpow.pop %v767
    %v769 = vmul.f32 %v766, 1.442695
    %v770 = vpow.pop %v769
    %v771 = vsel %vm540, %v768, 0.0
    %772 = vadd.xlane.f32.xlu0 %v771
    %v773 = vpop.xlane.xlu0 %772
    %v774 = vsel %vm540, %v770, 0.0
    %775 = vadd.xlane.f32.xlu0 %v774
    %v776 = vpop.xlane.xlu0 %775
    %v777 = vrcp.pop %v773
    %v778 = vrcp.pop %v776
    %v779 = vmul.f32 %v768, %v777
    %v780 = vmul.f32 %v770, %v778
    %v781 = vpack.c.bf16 %v779, %v779
    %v782 = vpack.c.bf16 %v780, %v780
    %783 = vrot.lane.b32.xlu0 %v428, 96
    %v784 = vpop.permute.xlu0 %783
    %v786 = vsel %vm540, %v781, 0
    %v789 = vsel %vm568, %v784, 0
    %791 = vmatprep.subr.bf16.mxu0 0
    %792 = vmatpush1.bf16.msra.mxu0 0
    %793 = vmatprep.subr.bf16.mxu0 0
    %794 = vmatpush1.bf16.msra.mxu0 0
    %795 = vmatprep.subr.bf16.mxu0 0
    %796 = vmatpush1.bf16.msra.mxu0 0
    %797 = vmatprep.subr.bf16.mxu0 0
    %798 = vmatpush1.bf16.msra.mxu0 0
    %799 = vmatprep.subr.bf16.mxu0 0
    %800 = vmatpush1.bf16.msra.mxu0 0
    %801 = vmatprep.subr.bf16.mxu0 0
    %802 = vmatpush1.bf16.msra.mxu0 0
    %803 = vmatprep.subr.bf16.mxu0 0
    %804 = vmatpush1.bf16.msra.mxu0 0
    %805 = vmatprep.subr.bf16.mxu0 0
    %806 = vmatpush1.bf16.msra.mxu0 %v789
    %807 = vmatprep.subr.bf16.mxu0 0
    %808 = vmatpush2.bf16.msra.mxu0 0
    %809 = vmatprep.subr.bf16.mxu0 0
    %810 = vmatpush2.bf16.msra.mxu0 0
    %811 = vmatprep.subr.bf16.mxu0 0
    %812 = vmatpush2.bf16.msra.mxu0 0
    %813 = vmatprep.subr.bf16.mxu0 0
    %814 = vmatpush2.bf16.msra.mxu0 0
    %815 = vmatprep.subr.bf16.mxu0 0
    %816 = vmatpush2.bf16.msra.mxu0 0
    %817 = vmatprep.subr.bf16.mxu0 0
    %818 = vmatpush2.bf16.msra.mxu0 0
    %819 = vmatprep.subr.bf16.mxu0 0
    %820 = vmatpush2.bf16.msra.mxu0 0
    %821 = vmatprep.subr.bf16.mxu0 0
    %822 = vmatpush2.bf16.msra.mxu0 0
    %823 = vmatprep.mubr.bf16.mxu0 0
    %824 = vmatmul.mubr.bf16.gmra.mxu0 %v786
    %v825 = vpop.f32.mrf.mxu0
    %v826 = vadd.f32 0.0, %v825
    %v827 = vpop.f32.mrf.mxu0
    %v828 = vpop.f32.mrf.mxu0
    %v829 = vpop.f32.mrf.mxu0
    %830 = vdwg.mxu0
    %831 = vrot.lane.b32.xlu0 %v429, 96
    %v832 = vpop.permute.xlu0 %831
    %v834 = vsel %vm540, %v782, 0
    %v837 = vsel %vm568, %v832, 0
    %839 = vmatprep.subr.bf16.mxu0 0
    %840 = vmatpush1.bf16.msra.mxu0 0
    %841 = vmatprep.subr.bf16.mxu0 0
    %842 = vmatpush1.bf16.msra.mxu0 0
    %843 = vmatprep.subr.bf16.mxu0 0
    %844 = vmatpush1.bf16.msra.mxu0 0
    %845 = vmatprep.subr.bf16.mxu0 0
    %846 = vmatpush1.bf16.msra.mxu0 0
    %847 = vmatprep.subr.bf16.mxu0 0
    %848 = vmatpush1.bf16.msra.mxu0 0
    %849 = vmatprep.subr.bf16.mxu0 0
    %850 = vmatpush1.bf16.msra.mxu0 0
    %851 = vmatprep.subr.bf16.mxu0 0
    %852 = vmatpush1.bf16.msra.mxu0 0
    %853 = vmatprep.subr.bf16.mxu0 0
    %854 = vmatpush1.bf16.msra.mxu0 %v837
    %855 = vmatprep.subr.bf16.mxu0 0
    %856 = vmatpush2.bf16.msra.mxu0 0
    %857 = vmatprep.subr.bf16.mxu0 0
    %858 = vmatpush2.bf16.msra.mxu0 0
    %859 = vmatprep.subr.bf16.mxu0 0
    %860 = vmatpush2.bf16.msra.mxu0 0
    %861 = vmatprep.subr.bf16.mxu0 0
    %862 = vmatpush2.bf16.msra.mxu0 0
    %863 = vmatprep.subr.bf16.mxu0 0
    %864 = vmatpush2.bf16.msra.mxu0 0
    %865 = vmatprep.subr.bf16.mxu0 0
    %866 = vmatpush2.bf16.msra.mxu0 0
    %867 = vmatprep.subr.bf16.mxu0 0
    %868 = vmatpush2.bf16.msra.mxu0 0
    %869 = vmatprep.subr.bf16.mxu0 0
    %870 = vmatpush2.bf16.msra.mxu0 0
    %871 = vmatprep.mubr.bf16.mxu0 0
    %872 = vmatmul.mubr.bf16.gmra.mxu0 %v834
    %v873 = vpop.f32.mrf.mxu0
    %v874 = vadd.f32 0.0, %v873
    %v875 = vpop.f32.mrf.mxu0
    %v876 = vpop.f32.mrf.mxu0
    %v877 = vpop.f32.mrf.mxu0
    %878 = vdwg.mxu0
    %v879 = vpack.c.bf16 %v874, %v826
    %v884 = vunpack.c.l.b16 %v435
    %v885 = vunpack.c.l.b16 %v436
    %v886 = vunpack.c.l.b16 %v437
    %v887 = vunpack.c.l.b16 %v438
    %v888 = vpack.c.b16 %v885, %v884
    %v889 = vpack.c.b16 %v887, %v886
    %v893 = vsel %vm447, %v879, 0
    %895 = vmatprep.subr.bf16.mxu0 0
    %896 = vmatpush1.bf16.msra.mxu0 0
    %897 = vmatprep.subr.bf16.mxu0 0
    %898 = vmatpush1.bf16.msra.mxu0 0
    %899 = vmatprep.subr.bf16.mxu0 0
    %900 = vmatpush1.bf16.msra.mxu0 0
    %901 = vmatprep.subr.bf16.mxu0 0
    %902 = vmatpush1.bf16.msra.mxu0 0
    %903 = vmatprep.subr.bf16.mxu0 0
    %904 = vmatpush1.bf16.msra.mxu0 0
    %905 = vmatprep.subr.bf16.mxu0 0
    %906 = vmatpush1.bf16.msra.mxu0 0
    %907 = vmatprep.subr.bf16.mxu0 0
    %908 = vmatpush1.bf16.msra.mxu0 %v889
    %909 = vmatprep.subr.bf16.mxu0 0
    %910 = vmatpush1.bf16.msra.mxu0 %v888
    %911 = vmatprep.subr.bf16.mxu0 0
    %912 = vmatpush2.bf16.msra.mxu0 0
    %913 = vmatprep.subr.bf16.mxu0 0
    %914 = vmatpush2.bf16.msra.mxu0 0
    %915 = vmatprep.subr.bf16.mxu0 0
    %916 = vmatpush2.bf16.msra.mxu0 0
    %917 = vmatprep.subr.bf16.mxu0 0
    %918 = vmatpush2.bf16.msra.mxu0 0
    %919 = vmatprep.subr.bf16.mxu0 0
    %920 = vmatpush2.bf16.msra.mxu0 0
    %921 = vmatprep.subr.bf16.mxu0 0
    %922 = vmatpush2.bf16.msra.mxu0 0
    %923 = vmatprep.subr.bf16.mxu0 0
    %924 = vmatpush2.bf16.msra.mxu0 0
    %925 = vmatprep.subr.bf16.mxu0 0
    %926 = vmatpush2.bf16.msra.mxu0 0
    %927 = vmatprep.mubr.bf16.mxu0 0
    %928 = vmatmul.mubr.bf16.gmra.mxu0 %v893
    %v929 = vpop.f32.mrf.mxu0
    %v930 = vadd.f32 0.0, %v929
    %v931 = vpop.f32.mrf.mxu0
    %v932 = vpop.f32.mrf.mxu0
    %v933 = vadd.f32 0.0, %v932
    %v934 = vpop.f32.mrf.mxu0
    %935 = vdwg.mxu0
    %v940 = vunpack.c.l.b16 %v431
    %v941 = vunpack.c.l.b16 %v432
    %v942 = vunpack.c.l.b16 %v433
    %v943 = vunpack.c.l.b16 %v434
    %v944 = vpack.c.b16 %v941, %v940
    %v945 = vpack.c.b16 %v943, %v942
    %v949 = vsel %vm447, %v658, 0
    %951 = vmatprep.subr.bf16.mxu0 0
    %952 = vmatpush1.bf16.msra.mxu0 0
    %953 = vmatprep.subr.bf16.mxu0 0
    %954 = vmatpush1.bf16.msra.mxu0 0
    %955 = vmatprep.subr.bf16.mxu0 0
    %956 = vmatpush1.bf16.msra.mxu0 0
    %957 = vmatprep.subr.bf16.mxu0 0
    %958 = vmatpush1.bf16.msra.mxu0 0
    %959 = vmatprep.subr.bf16.mxu0 0
    %960 = vmatpush1.bf16.msra.mxu0 0
    %961 = vmatprep.subr.bf16.mxu0 0
    %962 = vmatpush1.bf16.msra.mxu0 0
    %963 = vmatprep.subr.bf16.mxu0 0
    %964 = vmatpush1.bf16.msra.mxu0 %v945
    %965 = vmatprep.subr.bf16.mxu0 0
    %966 = vmatpush1.bf16.msra.mxu0 %v944
    %967 = vmatprep.subr.bf16.mxu0 0
    %968 = vmatpush2.bf16.msra.mxu0 0
    %969 = vmatprep.subr.bf16.mxu0 0
    %970 = vmatpush2.bf16.msra.mxu0 0
    %971 = vmatprep.subr.bf16.mxu0 0
    %972 = vmatpush2.bf16.msra.mxu0 0
    %973 = vmatprep.subr.bf16.mxu0 0
    %974 = vmatpush2.bf16.msra.mxu0 0
    %975 = vmatprep.subr.bf16.mxu0 0
    %976 = vmatpush2.bf16.msra.mxu0 0
    %977 = vmatprep.subr.bf16.mxu0 0
    %978 = vmatpush2.bf16.msra.mxu0 0
    %979 = vmatprep.subr.bf16.mxu0 0
    %980 = vmatpush2.bf16.msra.mxu0 0
    %981 = vmatprep.subr.bf16.mxu0 0
    %982 = vmatpush2.bf16.msra.mxu0 0
    %983 = vmatprep.mubr.bf16.mxu0 0
    %984 = vmatmul.mubr.bf16.gmra.mxu0 %v949
    %v985 = vpop.f32.mrf.mxu0
    %v986 = vadd.f32 %v930, %v985
    %v987 = vpop.f32.mrf.mxu0
    %v988 = vpop.f32.mrf.mxu0
    %v989 = vadd.f32 %v933, %v988
    %v990 = vpop.f32.mrf.mxu0
    %991 = vdwg.mxu0
    %992 = vrot.lane.b32.xlu0 %v416, 64
    %v993 = vpop.permute.xlu0 %992
    %994 = vrot.lane.b32.xlu0 %v422, 64
    %v995 = vpop.permute.xlu0 %994
    %v997 = vsel %vm447, %v993, 0
    %v1000 = vsel %vm447, %v995, 0
    %1002 = vmatprep.subr.bf16.mxu0 0
    %1003 = vmatpush1.bf16.xpose.msra.mxu0 0
    %1004 = vmatprep.subr.bf16.mxu0 0
    %1005 = vmatpush1.bf16.xpose.msra.mxu0 0
    %1006 = vmatprep.subr.bf16.mxu0 0
    %1007 = vmatpush1.bf16.xpose.msra.mxu0 0
    %1008 = vmatprep.subr.bf16.mxu0 0
    %1009 = vmatpush1.bf16.xpose.msra.mxu0 0
    %1010 = vmatprep.subr.bf16.mxu0 0
    %1011 = vmatpush1.bf16.xpose.msra.mxu0 0
    %1012 = vmatprep.subr.bf16.mxu0 0
    %1013 = vmatpush1.bf16.xpose.msra.mxu0 0
    %1014 = vmatprep.subr.bf16.mxu0 0
    %1015 = vmatpush1.bf16.xpose.msra.mxu0 0
    %1016 = vmatprep.subr.bf16.mxu0 0
    %1017 = vmatpush1.bf16.xpose.msra.mxu0 %v1000
    %1018 = vmatprep.subr.bf16.mxu0 0
    %1019 = vmatpush2.bf16.xpose.msra.mxu0 0
    %1020 = vmatprep.subr.bf16.mxu0 0
    %1021 = vmatpush2.bf16.xpose.msra.mxu0 0
    %1022 = vmatprep.subr.bf16.mxu0 0
    %1023 = vmatpush2.bf16.xpose.msra.mxu0 0
    %1024 = vmatprep.subr.bf16.mxu0 0
    %1025 = vmatpush2.bf16.xpose.msra.mxu0 0
    %1026 = vmatprep.subr.bf16.mxu0 0
    %1027 = vmatpush2.bf16.xpose.msra.mxu0 0
    %1028 = vmatprep.subr.bf16.mxu0 0
    %1029 = vmatpush2.bf16.xpose.msra.mxu0 0
    %1030 = vmatprep.subr.bf16.mxu0 0
    %1031 = vmatpush2.bf16.xpose.msra.mxu0 0
    %1032 = vmatprep.subr.bf16.mxu0 0
    %1033 = vmatpush2.bf16.xpose.msra.mxu0 0
    %1034 = vmatprep.mubr.bf16.mxu0 0
    %1035 = vmatmul.mubr.bf16.gmra.mxu0 %v997
    %v1036 = vpop.f32.mrf.mxu0
    %v1037 = vadd.f32 0.0, %v1036
    %v1038 = vpop.f32.mrf.mxu0
    %v1039 = vpop.f32.mrf.mxu0
    %v1040 = vpop.f32.mrf.mxu0
    %1041 = vdwg.mxu0
    %1042 = vrot.lane.b32.xlu0 %v417, 64
    %v1043 = vpop.permute.xlu0 %1042
    %1044 = vrot.lane.b32.xlu0 %v423, 64
    %v1045 = vpop.permute.xlu0 %1044
    %v1047 = vsel %vm447, %v1043, 0
    %v1050 = vsel %vm447, %v1045, 0
    %1052 = vmatprep.subr.bf16.mxu0 0
    %1053 = vmatpush1.bf16.xpose.msra.mxu0 0
    %1054 = vmatprep.subr.bf16.mxu0 0
    %1055 = vmatpush1.bf16.xpose.msra.mxu0 0
    %1056 = vmatprep.subr.bf16.mxu0 0
    %1057 = vmatpush1.bf16.xpose.msra.mxu0 0
    %1058 = vmatprep.subr.bf16.mxu0 0
    %1059 = vmatpush1.bf16.xpose.msra.mxu0 0
    %1060 = vmatprep.subr.bf16.mxu0 0
    %1061 = vmatpush1.bf16.xpose.msra.mxu0 0
    %1062 = vmatprep.subr.bf16.mxu0 0
    %1063 = vmatpush1.bf16.xpose.msra.mxu0 0
    %1064 = vmatprep.subr.bf16.mxu0 0
    %1065 = vmatpush1.bf16.xpose.msra.mxu0 0
    %1066 = vmatprep.subr.bf16.mxu0 0
    %1067 = vmatpush1.bf16.xpose.msra.mxu0 %v1050
    %1068 = vmatprep.subr.bf16.mxu0 0
    %1069 = vmatpush2.bf16.xpose.msra.mxu0 0
    %1070 = vmatprep.subr.bf16.mxu0 0
    %1071 = vmatpush2.bf16.xpose.msra.mxu0 0
    %1072 = vmatprep.subr.bf16.mxu0 0
    %1073 = vmatpush2.bf16.xpose.msra.mxu0 0
    %1074 = vmatprep.subr.bf16.mxu0 0
    %1075 = vmatpush2.bf16.xpose.msra.mxu0 0
    %1076 = vmatprep.subr.bf16.mxu0 0
    %1077 = vmatpush2.bf16.xpose.msra.mxu0 0
    %1078 = vmatprep.subr.bf16.mxu0 0
    %1079 = vmatpush2.bf16.xpose.msra.mxu0 0
    %1080 = vmatprep.subr.bf16.mxu0 0
    %1081 = vmatpush2.bf16.xpose.msra.mxu0 0
    %1082 = vmatprep.subr.bf16.mxu0 0
    %1083 = vmatpush2.bf16.xpose.msra.mxu0 0
    %1084 = vmatprep.mubr.bf16.mxu0 0
    %1085 = vmatmul.mubr.bf16.gmra.mxu0 %v1047
    %v1086 = vpop.f32.mrf.mxu0
    %v1087 = vadd.f32 0.0, %v1086
    %v1088 = vpop.f32.mrf.mxu0
    %v1089 = vpop.f32.mrf.mxu0
    %v1090 = vpop.f32.mrf.mxu0
    %1091 = vdwg.mxu0
    %v1092 = vsel %vm540, %v1037, -inf
    %1093 = vmax.xlane.f32.xlu0 %v1092
    %v1094 = vpop.xlane.xlu0 %1093
    %v1095 = vsel %vm540, %v1087, -inf
    %1096 = vmax.xlane.f32.xlu0 %v1095
    %v1097 = vpop.xlane.xlu0 %1096
    %v1098 = vsub.f32 %v1037, %v1094
    %v1099 = vsub.f32 %v1087, %v1097
    %v1100 = vmul.f32 %v1098, 1.442695
    %v1101 = vpow.pop %v1100
    %v1102 = vmul.f32 %v1099, 1.442695
    %v1103 = vpow.pop %v1102
    %v1104 = vsel %vm540, %v1101, 0.0
    %1105 = vadd.xlane.f32.xlu0 %v1104
    %v1106 = vpop.xlane.xlu0 %1105
    %v1107 = vsel %vm540, %v1103, 0.0
    %1108 = vadd.xlane.f32.xlu0 %v1107
    %v1109 = vpop.xlane.xlu0 %1108
    %v1110 = vrcp.pop %v1106
    %v1111 = vrcp.pop %v1109
    %v1112 = vmul.f32 %v1101, %v1110
    %v1113 = vmul.f32 %v1103, %v1111
    %v1114 = vpack.c.bf16 %v1112, %v1112
    %v1115 = vpack.c.bf16 %v1113, %v1113
    %1116 = vrot.lane.b32.xlu0 %v428, 64
    %v1117 = vpop.permute.xlu0 %1116
    %v1119 = vsel %vm540, %v1114, 0
    %v1122 = vsel %vm568, %v1117, 0
    %1124 = vmatprep.subr.bf16.mxu0 0
    %1125 = vmatpush1.bf16.msra.mxu0 0
    %1126 = vmatprep.subr.bf16.mxu0 0
    %1127 = vmatpush1.bf16.msra.mxu0 0
    %1128 = vmatprep.subr.bf16.mxu0 0
    %1129 = vmatpush1.bf16.msra.mxu0 0
    %1130 = vmatprep.subr.bf16.mxu0 0
    %1131 = vmatpush1.bf16.msra.mxu0 0
    %1132 = vmatprep.subr.bf16.mxu0 0
    %1133 = vmatpush1.bf16.msra.mxu0 0
    %1134 = vmatprep.subr.bf16.mxu0 0
    %1135 = vmatpush1.bf16.msra.mxu0 0
    %1136 = vmatprep.subr.bf16.mxu0 0
    %1137 = vmatpush1.bf16.msra.mxu0 0
    %1138 = vmatprep.subr.bf16.mxu0 0
    %1139 = vmatpush1.bf16.msra.mxu0 %v1122
    %1140 = vmatprep.subr.bf16.mxu0 0
    %1141 = vmatpush2.bf16.msra.mxu0 0
    %1142 = vmatprep.subr.bf16.mxu0 0
    %1143 = vmatpush2.bf16.msra.mxu0 0
    %1144 = vmatprep.subr.bf16.mxu0 0
    %1145 = vmatpush2.bf16.msra.mxu0 0
    %1146 = vmatprep.subr.bf16.mxu0 0
    %1147 = vmatpush2.bf16.msra.mxu0 0
    %1148 = vmatprep.subr.bf16.mxu0 0
    %1149 = vmatpush2.bf16.msra.mxu0 0
    %1150 = vmatprep.subr.bf16.mxu0 0
    %1151 = vmatpush2.bf16.msra.mxu0 0
    %1152 = vmatprep.subr.bf16.mxu0 0
    %1153 = vmatpush2.bf16.msra.mxu0 0
    %1154 = vmatprep.subr.bf16.mxu0 0
    %1155 = vmatpush2.bf16.msra.mxu0 0
    %1156 = vmatprep.mubr.bf16.mxu0 0
    %1157 = vmatmul.mubr.bf16.gmra.mxu0 %v1119
    %v1158 = vpop.f32.mrf.mxu0
    %v1159 = vadd.f32 0.0, %v1158
    %v1160 = vpop.f32.mrf.mxu0
    %v1161 = vpop.f32.mrf.mxu0
    %v1162 = vpop.f32.mrf.mxu0
    %1163 = vdwg.mxu0
    %1164 = vrot.lane.b32.xlu0 %v429, 64
    %v1165 = vpop.permute.xlu0 %1164
    %v1167 = vsel %vm540, %v1115, 0
    %v1170 = vsel %vm568, %v1165, 0
    %1172 = vmatprep.subr.bf16.mxu0 0
    %1173 = vmatpush1.bf16.msra.mxu0 0
    %1174 = vmatprep.subr.bf16.mxu0 0
    %1175 = vmatpush1.bf16.msra.mxu0 0
    %1176 = vmatprep.subr.bf16.mxu0 0
    %1177 = vmatpush1.bf16.msra.mxu0 0
    %1178 = vmatprep.subr.bf16.mxu0 0
    %1179 = vmatpush1.bf16.msra.mxu0 0
    %1180 = vmatprep.subr.bf16.mxu0 0
    %1181 = vmatpush1.bf16.msra.mxu0 0
    %1182 = vmatprep.subr.bf16.mxu0 0
    %1183 = vmatpush1.bf16.msra.mxu0 0
    %1184 = vmatprep.subr.bf16.mxu0 0
    %1185 = vmatpush1.bf16.msra.mxu0 0
    %1186 = vmatprep.subr.bf16.mxu0 0
    %1187 = vmatpush1.bf16.msra.mxu0 %v1170
    %1188 = vmatprep.subr.bf16.mxu0 0
    %1189 = vmatpush2.bf16.msra.mxu0 0
    %1190 = vmatprep.subr.bf16.mxu0 0
    %1191 = vmatpush2.bf16.msra.mxu0 0
    %1192 = vmatprep.subr.bf16.mxu0 0
    %1193 = vmatpush2.bf16.msra.mxu0 0
    %1194 = vmatprep.subr.bf16.mxu0 0
    %1195 = vmatpush2.bf16.msra.mxu0 0
    %1196 = vmatprep.subr.bf16.mxu0 0
    %1197 = vmatpush2.bf16.msra.mxu0 0
    %1198 = vmatprep.subr.bf16.mxu0 0
    %1199 = vmatpush2.bf16.msra.mxu0 0
    %1200 = vmatprep.subr.bf16.mxu0 0
    %1201 = vmatpush2.bf16.msra.mxu0 0
    %1202 = vmatprep.subr.bf16.mxu0 0
    %1203 = vmatpush2.bf16.msra.mxu0 0
    %1204 = vmatprep.mubr.bf16.mxu0 0
    %1205 = vmatmul.mubr.bf16.gmra.mxu0 %v1167
    %v1206 = vpop.f32.mrf.mxu0
    %v1207 = vadd.f32 0.0, %v1206
    %v1208 = vpop.f32.mrf.mxu0
    %v1209 = vpop.f32.mrf.mxu0
    %v1210 = vpop.f32.mrf.mxu0
    %1211 = vdwg.mxu0
    %v1212 = vpack.c.bf16 %v1207, %v1159
    %v1217 = vunpack.c.l.b16 %v439
    %v1218 = vunpack.c.l.b16 %v440
    %v1219 = vunpack.c.l.b16 %v441
    %v1220 = vunpack.c.l.b16 %v442
    %v1221 = vpack.c.b16 %v1218, %v1217
    %v1222 = vpack.c.b16 %v1220, %v1219
    %v1226 = vsel %vm447, %v1212, 0
    %1228 = vmatprep.subr.bf16.mxu0 0
    %1229 = vmatpush1.bf16.msra.mxu0 0
    %1230 = vmatprep.subr.bf16.mxu0 0
    %1231 = vmatpush1.bf16.msra.mxu0 0
    %1232 = vmatprep.subr.bf16.mxu0 0
    %1233 = vmatpush1.bf16.msra.mxu0 0
    %1234 = vmatprep.subr.bf16.mxu0 0
    %1235 = vmatpush1.bf16.msra.mxu0 0
    %1236 = vmatprep.subr.bf16.mxu0 0
    %1237 = vmatpush1.bf16.msra.mxu0 0
    %1238 = vmatprep.subr.bf16.mxu0 0
    %1239 = vmatpush1.bf16.msra.mxu0 0
    %1240 = vmatprep.subr.bf16.mxu0 0
    %1241 = vmatpush1.bf16.msra.mxu0 %v1222
    %1242 = vmatprep.subr.bf16.mxu0 0
    %1243 = vmatpush1.bf16.msra.mxu0 %v1221
    %1244 = vmatprep.subr.bf16.mxu0 0
    %1245 = vmatpush2.bf16.msra.mxu0 0
    %1246 = vmatprep.subr.bf16.mxu0 0
    %1247 = vmatpush2.bf16.msra.mxu0 0
    %1248 = vmatprep.subr.bf16.mxu0 0
    %1249 = vmatpush2.bf16.msra.mxu0 0
    %1250 = vmatprep.subr.bf16.mxu0 0
    %1251 = vmatpush2.bf16.msra.mxu0 0
    %1252 = vmatprep.subr.bf16.mxu0 0
    %1253 = vmatpush2.bf16.msra.mxu0 0
    %1254 = vmatprep.subr.bf16.mxu0 0
    %1255 = vmatpush2.bf16.msra.mxu0 0
    %1256 = vmatprep.subr.bf16.mxu0 0
    %1257 = vmatpush2.bf16.msra.mxu0 0
    %1258 = vmatprep.subr.bf16.mxu0 0
    %1259 = vmatpush2.bf16.msra.mxu0 0
    %1260 = vmatprep.mubr.bf16.mxu0 0
    %1261 = vmatmul.mubr.bf16.gmra.mxu0 %v1226
    %v1262 = vpop.f32.mrf.mxu0
    %v1263 = vadd.f32 0.0, %v1262
    %v1264 = vpop.f32.mrf.mxu0
    %v1265 = vpop.f32.mrf.mxu0
    %v1266 = vadd.f32 0.0, %v1265
    %v1267 = vpop.f32.mrf.mxu0
    %1268 = vdwg.mxu0
    %v1269 = vadd.f32 %v986, %v1263
    %v1270 = vadd.f32 %v989, %v1266
    %1271 = vrot.lane.b32.xlu0 %v416, 32
    %v1272 = vpop.permute.xlu0 %1271
    %1273 = vrot.lane.b32.xlu0 %v422, 32
    %v1274 = vpop.permute.xlu0 %1273
    %v1276 = vsel %vm447, %v1272, 0
    %v1279 = vsel %vm447, %v1274, 0
    %1281 = vmatprep.subr.bf16.mxu0 0
    %1282 = vmatpush1.bf16.xpose.msra.mxu0 0
    %1283 = vmatprep.subr.bf16.mxu0 0
    %1284 = vmatpush1.bf16.xpose.msra.mxu0 0
    %1285 = vmatprep.subr.bf16.mxu0 0
    %1286 = vmatpush1.bf16.xpose.msra.mxu0 0
    %1287 = vmatprep.subr.bf16.mxu0 0
    %1288 = vmatpush1.bf16.xpose.msra.mxu0 0
    %1289 = vmatprep.subr.bf16.mxu0 0
    %1290 = vmatpush1.bf16.xpose.msra.mxu0 0
    %1291 = vmatprep.subr.bf16.mxu0 0
    %1292 = vmatpush1.bf16.xpose.msra.mxu0 0
    %1293 = vmatprep.subr.bf16.mxu0 0
    %1294 = vmatpush1.bf16.xpose.msra.mxu0 0
    %1295 = vmatprep.subr.bf16.mxu0 0
    %1296 = vmatpush1.bf16.xpose.msra.mxu0 %v1279
    %1297 = vmatprep.subr.bf16.mxu0 0
    %1298 = vmatpush2.bf16.xpose.msra.mxu0 0
    %1299 = vmatprep.subr.bf16.mxu0 0
    %1300 = vmatpush2.bf16.xpose.msra.mxu0 0
    %1301 = vmatprep.subr.bf16.mxu0 0
    %1302 = vmatpush2.bf16.xpose.msra.mxu0 0
    %1303 = vmatprep.subr.bf16.mxu0 0
    %1304 = vmatpush2.bf16.xpose.msra.mxu0 0
    %1305 = vmatprep.subr.bf16.mxu0 0
    %1306 = vmatpush2.bf16.xpose.msra.mxu0 0
    %1307 = vmatprep.subr.bf16.mxu0 0
    %1308 = vmatpush2.bf16.xpose.msra.mxu0 0
    %1309 = vmatprep.subr.bf16.mxu0 0
    %1310 = vmatpush2.bf16.xpose.msra.mxu0 0
    %1311 = vmatprep.subr.bf16.mxu0 0
    %1312 = vmatpush2.bf16.xpose.msra.mxu0 0
    %1313 = vmatprep.mubr.bf16.mxu0 0
    %1314 = vmatmul.mubr.bf16.gmra.mxu0 %v1276
    %v1315 = vpop.f32.mrf.mxu0
    %v1316 = vadd.f32 0.0, %v1315
    %v1317 = vpop.f32.mrf.mxu0
    %v1318 = vpop.f32.mrf.mxu0
    %v1319 = vpop.f32.mrf.mxu0
    %1320 = vdwg.mxu0
    %1321 = vrot.lane.b32.xlu0 %v417, 32
    %v1322 = vpop.permute.xlu0 %1321
    %1323 = vrot.lane.b32.xlu0 %v423, 32
    %v1324 = vpop.permute.xlu0 %1323
    %v1326 = vsel %vm447, %v1322, 0
    %v1329 = vsel %vm447, %v1324, 0
    %1331 = vmatprep.subr.bf16.mxu0 0
    %1332 = vmatpush1.bf16.xpose.msra.mxu0 0
    %1333 = vmatprep.subr.bf16.mxu0 0
    %1334 = vmatpush1.bf16.xpose.msra.mxu0 0
    %1335 = vmatprep.subr.bf16.mxu0 0
    %1336 = vmatpush1.bf16.xpose.msra.mxu0 0
    %1337 = vmatprep.subr.bf16.mxu0 0
    %1338 = vmatpush1.bf16.xpose.msra.mxu0 0
    %1339 = vmatprep.subr.bf16.mxu0 0
    %1340 = vmatpush1.bf16.xpose.msra.mxu0 0
    %1341 = vmatprep.subr.bf16.mxu0 0
    %1342 = vmatpush1.bf16.xpose.msra.mxu0 0
    %1343 = vmatprep.subr.bf16.mxu0 0
    %1344 = vmatpush1.bf16.xpose.msra.mxu0 0
    %1345 = vmatprep.subr.bf16.mxu0 0
    %1346 = vmatpush1.bf16.xpose.msra.mxu0 %v1329
    %1347 = vmatprep.subr.bf16.mxu0 0
    %1348 = vmatpush2.bf16.xpose.msra.mxu0 0
    %1349 = vmatprep.subr.bf16.mxu0 0
    %1350 = vmatpush2.bf16.xpose.msra.mxu0 0
    %1351 = vmatprep.subr.bf16.mxu0 0
    %1352 = vmatpush2.bf16.xpose.msra.mxu0 0
    %1353 = vmatprep.subr.bf16.mxu0 0
    %1354 = vmatpush2.bf16.xpose.msra.mxu0 0
    %1355 = vmatprep.subr.bf16.mxu0 0
    %1356 = vmatpush2.bf16.xpose.msra.mxu0 0
    %1357 = vmatprep.subr.bf16.mxu0 0
    %1358 = vmatpush2.bf16.xpose.msra.mxu0 0
    %1359 = vmatprep.subr.bf16.mxu0 0
    %1360 = vmatpush2.bf16.xpose.msra.mxu0 0
    %1361 = vmatprep.subr.bf16.mxu0 0
    %1362 = vmatpush2.bf16.xpose.msra.mxu0 0
    %1363 = vmatprep.mubr.bf16.mxu0 0
    %1364 = vmatmul.mubr.bf16.gmra.mxu0 %v1326
    %v1365 = vpop.f32.mrf.mxu0
    %v1366 = vadd.f32 0.0, %v1365
    %v1367 = vpop.f32.mrf.mxu0
    %v1368 = vpop.f32.mrf.mxu0
    %v1369 = vpop.f32.mrf.mxu0
    %1370 = vdwg.mxu0
    %v1371 = vsel %vm540, %v1316, -inf
    %1372 = vmax.xlane.f32.xlu0 %v1371
    %v1373 = vpop.xlane.xlu0 %1372
    %v1374 = vsel %vm540, %v1366, -inf
    %1375 = vmax.xlane.f32.xlu0 %v1374
    %v1376 = vpop.xlane.xlu0 %1375
    %v1377 = vsub.f32 %v1316, %v1373
    %v1378 = vsub.f32 %v1366, %v1376
    %v1379 = vmul.f32 %v1377, 1.442695
    %v1380 = vpow.pop %v1379
    %v1381 = vmul.f32 %v1378, 1.442695
    %v1382 = vpow.pop %v1381
    %v1383 = vsel %vm540, %v1380, 0.0
    %1384 = vadd.xlane.f32.xlu0 %v1383
    %v1385 = vpop.xlane.xlu0 %1384
    %v1386 = vsel %vm540, %v1382, 0.0
    %1387 = vadd.xlane.f32.xlu0 %v1386
    %v1388 = vpop.xlane.xlu0 %1387
    %v1389 = vrcp.pop %v1385
    %v1390 = vrcp.pop %v1388
    %v1391 = vmul.f32 %v1380, %v1389
    %v1392 = vmul.f32 %v1382, %v1390
    %v1393 = vpack.c.bf16 %v1391, %v1391
    %v1394 = vpack.c.bf16 %v1392, %v1392
    %1395 = vrot.lane.b32.xlu0 %v428, 32
    %v1396 = vpop.permute.xlu0 %1395
    %v1398 = vsel %vm540, %v1393, 0
    %v1401 = vsel %vm568, %v1396, 0
    %1403 = vmatprep.subr.bf16.mxu0 0
    %1404 = vmatpush1.bf16.msra.mxu0 0
    %1405 = vmatprep.subr.bf16.mxu0 0
    %1406 = vmatpush1.bf16.msra.mxu0 0
    %1407 = vmatprep.subr.bf16.mxu0 0
    %1408 = vmatpush1.bf16.msra.mxu0 0
    %1409 = vmatprep.subr.bf16.mxu0 0
    %1410 = vmatpush1.bf16.msra.mxu0 0
    %1411 = vmatprep.subr.bf16.mxu0 0
    %1412 = vmatpush1.bf16.msra.mxu0 0
    %1413 = vmatprep.subr.bf16.mxu0 0
    %1414 = vmatpush1.bf16.msra.mxu0 0
    %1415 = vmatprep.subr.bf16.mxu0 0
    %1416 = vmatpush1.bf16.msra.mxu0 0
    %1417 = vmatprep.subr.bf16.mxu0 0
    %1418 = vmatpush1.bf16.msra.mxu0 %v1401
    %1419 = vmatprep.subr.bf16.mxu0 0
    %1420 = vmatpush2.bf16.msra.mxu0 0
    %1421 = vmatprep.subr.bf16.mxu0 0
    %1422 = vmatpush2.bf16.msra.mxu0 0
    %1423 = vmatprep.subr.bf16.mxu0 0
    %1424 = vmatpush2.bf16.msra.mxu0 0
    %1425 = vmatprep.subr.bf16.mxu0 0
    %1426 = vmatpush2.bf16.msra.mxu0 0
    %1427 = vmatprep.subr.bf16.mxu0 0
    %1428 = vmatpush2.bf16.msra.mxu0 0
    %1429 = vmatprep.subr.bf16.mxu0 0
    %1430 = vmatpush2.bf16.msra.mxu0 0
    %1431 = vmatprep.subr.bf16.mxu0 0
    %1432 = vmatpush2.bf16.msra.mxu0 0
    %1433 = vmatprep.subr.bf16.mxu0 0
    %1434 = vmatpush2.bf16.msra.mxu0 0
    %1435 = vmatprep.mubr.bf16.mxu0 0
    %1436 = vmatmul.mubr.bf16.gmra.mxu0 %v1398
    %v1437 = vpop.f32.mrf.mxu0
    %v1438 = vadd.f32 0.0, %v1437
    %v1439 = vpop.f32.mrf.mxu0
    %v1440 = vpop.f32.mrf.mxu0
    %v1441 = vpop.f32.mrf.mxu0
    %1442 = vdwg.mxu0
    %1443 = vrot.lane.b32.xlu0 %v429, 32
    %v1444 = vpop.permute.xlu0 %1443
    %v1446 = vsel %vm540, %v1394, 0
    %v1449 = vsel %vm568, %v1444, 0
    %1451 = vmatprep.subr.bf16.mxu0 0
    %1452 = vmatpush1.bf16.msra.mxu0 0
    %1453 = vmatprep.subr.bf16.mxu0 0
    %1454 = vmatpush1.bf16.msra.mxu0 0
    %1455 = vmatprep.subr.bf16.mxu0 0
    %1456 = vmatpush1.bf16.msra.mxu0 0
    %1457 = vmatprep.subr.bf16.mxu0 0
    %1458 = vmatpush1.bf16.msra.mxu0 0
    %1459 = vmatprep.subr.bf16.mxu0 0
    %1460 = vmatpush1.bf16.msra.mxu0 0
    %1461 = vmatprep.subr.bf16.mxu0 0
    %1462 = vmatpush1.bf16.msra.mxu0 0
    %1463 = vmatprep.subr.bf16.mxu0 0
    %1464 = vmatpush1.bf16.msra.mxu0 0
    %1465 = vmatprep.subr.bf16.mxu0 0
    %1466 = vmatpush1.bf16.msra.mxu0 %v1449
    %1467 = vmatprep.subr.bf16.mxu0 0
    %1468 = vmatpush2.bf16.msra.mxu0 0
    %1469 = vmatprep.subr.bf16.mxu0 0
    %1470 = vmatpush2.bf16.msra.mxu0 0
    %1471 = vmatprep.subr.bf16.mxu0 0
    %1472 = vmatpush2.bf16.msra.mxu0 0
    %1473 = vmatprep.subr.bf16.mxu0 0
    %1474 = vmatpush2.bf16.msra.mxu0 0
    %1475 = vmatprep.subr.bf16.mxu0 0
    %1476 = vmatpush2.bf16.msra.mxu0 0
    %1477 = vmatprep.subr.bf16.mxu0 0
    %1478 = vmatpush2.bf16.msra.mxu0 0
    %1479 = vmatprep.subr.bf16.mxu0 0
    %1480 = vmatpush2.bf16.msra.mxu0 0
    %1481 = vmatprep.subr.bf16.mxu0 0
    %1482 = vmatpush2.bf16.msra.mxu0 0
    %1483 = vmatprep.mubr.bf16.mxu0 0
    %1484 = vmatmul.mubr.bf16.gmra.mxu0 %v1446
    %v1485 = vpop.f32.mrf.mxu0
    %v1486 = vadd.f32 0.0, %v1485
    %v1487 = vpop.f32.mrf.mxu0
    %v1488 = vpop.f32.mrf.mxu0
    %v1489 = vpop.f32.mrf.mxu0
    %1490 = vdwg.mxu0
    %v1491 = vpack.c.bf16 %v1486, %v1438
    %v1496 = vunpack.c.l.b16 %v443
    %v1497 = vunpack.c.l.b16 %v444
    %v1498 = vunpack.c.l.b16 %v445
    %v1499 = vunpack.c.l.b16 %v446
    %v1500 = vpack.c.b16 %v1497, %v1496
    %v1501 = vpack.c.b16 %v1499, %v1498
    %v1505 = vsel %vm447, %v1491, 0
    %1507 = vmatprep.subr.bf16.mxu0 0
    %1508 = vmatpush1.bf16.msra.mxu0 0
    %1509 = vmatprep.subr.bf16.mxu0 0
    %1510 = vmatpush1.bf16.msra.mxu0 0
    %1511 = vmatprep.subr.bf16.mxu0 0
    %1512 = vmatpush1.bf16.msra.mxu0 0
    %1513 = vmatprep.subr.bf16.mxu0 0
    %1514 = vmatpush1.bf16.msra.mxu0 0
    %1515 = vmatprep.subr.bf16.mxu0 0
    %1516 = vmatpush1.bf16.msra.mxu0 0
    %1517 = vmatprep.subr.bf16.mxu0 0
    %1518 = vmatpush1.bf16.msra.mxu0 0
    %1519 = vmatprep.subr.bf16.mxu0 0
    %1520 = vmatpush1.bf16.msra.mxu0 %v1501
    %1521 = vmatprep.subr.bf16.mxu0 0
    %1522 = vmatpush1.bf16.msra.mxu0 %v1500
    %1523 = vmatprep.subr.bf16.mxu0 0
    %1524 = vmatpush2.bf16.msra.mxu0 0
    %1525 = vmatprep.subr.bf16.mxu0 0
    %1526 = vmatpush2.bf16.msra.mxu0 0
    %1527 = vmatprep.subr.bf16.mxu0 0
    %1528 = vmatpush2.bf16.msra.mxu0 0
    %1529 = vmatprep.subr.bf16.mxu0 0
    %1530 = vmatpush2.bf16.msra.mxu0 0
    %1531 = vmatprep.subr.bf16.mxu0 0
    %1532 = vmatpush2.bf16.msra.mxu0 0
    %1533 = vmatprep.subr.bf16.mxu0 0
    %1534 = vmatpush2.bf16.msra.mxu0 0
    %1535 = vmatprep.subr.bf16.mxu0 0
    %1536 = vmatpush2.bf16.msra.mxu0 0
    %1537 = vmatprep.subr.bf16.mxu0 0
    %1538 = vmatpush2.bf16.msra.mxu0 0
    %1539 = vmatprep.mubr.bf16.mxu0 0
    %1540 = vmatmul.mubr.bf16.gmra.mxu0 %v1505
    %v1541 = vpop.f32.mrf.mxu0
    %v1542 = vadd.f32 0.0, %v1541
    %v1543 = vpop.f32.mrf.mxu0
    %v1544 = vpop.f32.mrf.mxu0
    %v1545 = vadd.f32 0.0, %v1544
    %v1546 = vpop.f32.mrf.mxu0
    %1547 = vdwg.mxu0
    %v1548 = vadd.f32 %v1269, %v1542
    %v1549 = vadd.f32 %v1270, %v1545
    %v1550 = vlaneseq
    %v1551 = vshrl.u32 %v1550, 7
    %v1552 = vsub.s32 3, %v1551
    %v1553 = vrot.slane %v76, %v1552
    %v1554 = vadd.f32 %v1548, %v1553
    %v1555 = vadd.f32 %v1549, %v1553
    %v1556 = vadd.f32 %v1554, %v72
    %v1557 = vadd.f32 %v1555, %v73
    %1558 = vadd.xlane.f32.xlu0 %v1556
    %v1559 = vpop.xlane.xlu0 %1558
    %1560 = vadd.xlane.f32.xlu0 %v1557
    %v1561 = vpop.xlane.xlu0 %1560
    %v1562 = vrcp.pop 128.0
    %v1563 = vmul.f32 %v1559, %v1562
    %v1564 = vmul.f32 %v1561, %v1562
    %v1565 = vmul.f32 %v1556, %v1556
    %v1566 = vmul.f32 %v1557, %v1557
    %1567 = vadd.xlane.f32.xlu0 %v1565
    %v1568 = vpop.xlane.xlu0 %1567
    %1569 = vadd.xlane.f32.xlu0 %v1566
    %v1570 = vpop.xlane.xlu0 %1569
    %v1571 = vmul.f32 %v1568, %v1562
    %v1572 = vmul.f32 %v1570, %v1562
    %v1573 = vmul.f32 %v1563, %v1563
    %v1574 = vmul.f32 %v1564, %v1564
    %v1575 = vsub.f32 %v1571, %v1573
    %v1576 = vsub.f32 %v1572, %v1574
    %v1577 = vsub.f32 %v1556, %v1563
    %v1578 = vsub.f32 %v1557, %v1564
    %v1579 = vadd.f32 %v1575, 1e-05
    %v1580 = vadd.f32 %v1576, 1e-05
    %v1581 = vrsqrt.pop %v1579
    %v1582 = vrsqrt.pop %v1580
    %v1583 = vmul.f32 %v1577, %v1581
    %v1584 = vmul.f32 %v1578, %v1582
    %v1585 = vlaneseq
    %v1586 = vshrl.u32 %v1585, 7
    %v1587 = vsub.s32 4, %v1586
    %v1588 = vrot.slane %v76, %v1587
    %v1589 = vmul.f32 %v1583, %v1588
    %v1590 = vmul.f32 %v1584, %v1588
    %v1591 = vlaneseq
    %v1592 = vshrl.u32 %v1591, 7
    %v1593 = vsub.s32 5, %v1592
    %v1594 = vrot.slane %v76, %v1593
    %v1595 = vadd.f32 %v1589, %v1594
    %v1596 = vadd.f32 %v1590, %v1594
    %v1597 = vpack.c.bf16 %v1596, %v1595
    %s1598 = scalar_lea.vmem [#allocation7], 256
    %v1599 = vld [vmem:[%s1598] sm:$0xf]
    %v1600 = vld [vmem:[%s1598 + $0x4] sm:$0xf]
    %v1601 = vld [vmem:[%s1598 + $0x8] sm:$0xf]
    %v1602 = vld [vmem:[%s1598 + $0xc] sm:$0xf]
    %v1603 = vld [vmem:[%s1598 + $0x10] sm:$0xf]
    %v1604 = vld [vmem:[%s1598 + $0x14] sm:$0xf]
    %v1605 = vld [vmem:[%s1598 + $0x18] sm:$0xf]
    %v1606 = vld [vmem:[%s1598 + $0x1c] sm:$0xf]
    %v1607 = vld [vmem:[%s1598 + $0x20] sm:$0xf]
    %v1608 = vld [vmem:[%s1598 + $0x24] sm:$0xf]
    %v1609 = vld [vmem:[%s1598 + $0x28] sm:$0xf]
    %v1610 = vld [vmem:[%s1598 + $0x2c] sm:$0xf]
    %v1611 = vld [vmem:[%s1598 + $0x30] sm:$0xf]
    %v1612 = vld [vmem:[%s1598 + $0x34] sm:$0xf]
    %v1613 = vld [vmem:[%s1598 + $0x38] sm:$0xf]
    %v1614 = vld [vmem:[%s1598 + $0x3c] sm:$0xf]
    %v1631 = vunpack.c.l.b16 %v1599
    %v1632 = vunpack.c.l.b16 %v1600
    %v1633 = vunpack.c.l.b16 %v1601
    %v1634 = vunpack.c.l.b16 %v1602
    %v1635 = vunpack.c.l.b16 %v1603
    %v1636 = vunpack.c.l.b16 %v1604
    %v1637 = vunpack.c.l.b16 %v1605
    %v1638 = vunpack.c.l.b16 %v1606
    %v1639 = vunpack.c.l.b16 %v1607
    %v1640 = vunpack.c.l.b16 %v1608
    %v1641 = vunpack.c.l.b16 %v1609
    %v1642 = vunpack.c.l.b16 %v1610
    %v1643 = vunpack.c.l.b16 %v1611
    %v1644 = vunpack.c.l.b16 %v1612
    %v1645 = vunpack.c.l.b16 %v1613
    %v1646 = vunpack.c.l.b16 %v1614
    %v1647 = vpack.c.b16 %v1632, %v1631
    %v1648 = vpack.c.b16 %v1634, %v1633
    %v1649 = vpack.c.b16 %v1636, %v1635
    %v1650 = vpack.c.b16 %v1638, %v1637
    %v1651 = vpack.c.b16 %v1640, %v1639
    %v1652 = vpack.c.b16 %v1642, %v1641
    %v1653 = vpack.c.b16 %v1644, %v1643
    %v1654 = vpack.c.b16 %v1646, %v1645
    %1663 = vmatprep.subr.bf16.mxu0 0
    %1664 = vmatpush1.bf16.msra.mxu0 %v1654
    %1665 = vmatprep.subr.bf16.mxu0 0
    %1666 = vmatpush1.bf16.msra.mxu0 %v1653
    %1667 = vmatprep.subr.bf16.mxu0 0
    %1668 = vmatpush1.bf16.msra.mxu0 %v1652
    %1669 = vmatprep.subr.bf16.mxu0 0
    %1670 = vmatpush1.bf16.msra.mxu0 %v1651
    %1671 = vmatprep.subr.bf16.mxu0 0
    %1672 = vmatpush1.bf16.msra.mxu0 %v1650
    %1673 = vmatprep.subr.bf16.mxu0 0
    %1674 = vmatpush1.bf16.msra.mxu0 %v1649
    %1675 = vmatprep.subr.bf16.mxu0 0
    %1676 = vmatpush1.bf16.msra.mxu0 %v1648
    %1677 = vmatprep.subr.bf16.mxu0 0
    %1678 = vmatpush1.bf16.msra.mxu0 %v1647
    %1679 = vmatprep.subr.bf16.mxu0 0
    %1680 = vmatpush2.bf16.msra.mxu0 0
    %1681 = vmatprep.subr.bf16.mxu0 0
    %1682 = vmatpush2.bf16.msra.mxu0 0
    %1683 = vmatprep.subr.bf16.mxu0 0
    %1684 = vmatpush2.bf16.msra.mxu0 0
    %1685 = vmatprep.subr.bf16.mxu0 0
    %1686 = vmatpush2.bf16.msra.mxu0 0
    %1687 = vmatprep.subr.bf16.mxu0 0
    %1688 = vmatpush2.bf16.msra.mxu0 0
    %1689 = vmatprep.subr.bf16.mxu0 0
    %1690 = vmatpush2.bf16.msra.mxu0 0
    %1691 = vmatprep.subr.bf16.mxu0 0
    %1692 = vmatpush2.bf16.msra.mxu0 0
    %1693 = vmatprep.subr.bf16.mxu0 0
    %1694 = vmatpush2.bf16.msra.mxu0 0
    %1695 = vmatprep.mubr.bf16.mxu0 0
    %1696 = vmatmul.mubr.bf16.gmra.mxu0 %v1597
    %v1697 = vpop.f32.mrf.mxu0
    %v1698 = vadd.f32 0.0, %v1697
    %v1699 = vpop.f32.mrf.mxu0
    %v1700 = vpop.f32.mrf.mxu0
    %v1701 = vadd.f32 0.0, %v1700
    %v1702 = vpop.f32.mrf.mxu0
    %1703 = vdwg.mxu0
    %v1704 = vmax.f32 %v1698, 0.0
    %v1705 = vmax.f32 %v1701, 0.0
    %v1706 = vpack.c.bf16 %v1705, %v1704
    %s1707 = scalar_lea.vmem [#allocation7], 320
    %v1708 = vld [vmem:[%s1707] sm:$0xf]
    %v1709 = vld [vmem:[%s1707 + $0x4] sm:$0xf]
    %v1710 = vld [vmem:[%s1707 + $0x8] sm:$0xf]
    %v1711 = vld [vmem:[%s1707 + $0xc] sm:$0xf]
    %v1712 = vld [vmem:[%s1707 + $0x10] sm:$0xf]
    %v1713 = vld [vmem:[%s1707 + $0x14] sm:$0xf]
    %v1714 = vld [vmem:[%s1707 + $0x18] sm:$0xf]
    %v1715 = vld [vmem:[%s1707 + $0x1c] sm:$0xf]
    %v1716 = vld [vmem:[%s1707 + $0x20] sm:$0xf]
    %v1717 = vld [vmem:[%s1707 + $0x24] sm:$0xf]
    %v1718 = vld [vmem:[%s1707 + $0x28] sm:$0xf]
    %v1719 = vld [vmem:[%s1707 + $0x2c] sm:$0xf]
    %v1720 = vld [vmem:[%s1707 + $0x30] sm:$0xf]
    %v1721 = vld [vmem:[%s1707 + $0x34] sm:$0xf]
    %v1722 = vld [vmem:[%s1707 + $0x38] sm:$0xf]
    %v1723 = vld [vmem:[%s1707 + $0x3c] sm:$0xf]
    %v1740 = vunpack.c.l.b16 %v1708
    %v1741 = vunpack.c.l.b16 %v1709
    %v1742 = vunpack.c.l.b16 %v1710
    %v1743 = vunpack.c.l.b16 %v1711
    %v1744 = vunpack.c.l.b16 %v1712
    %v1745 = vunpack.c.l.b16 %v1713
    %v1746 = vunpack.c.l.b16 %v1714
    %v1747 = vunpack.c.l.b16 %v1715
    %v1748 = vunpack.c.l.b16 %v1716
    %v1749 = vunpack.c.l.b16 %v1717
    %v1750 = vunpack.c.l.b16 %v1718
    %v1751 = vunpack.c.l.b16 %v1719
    %v1752 = vunpack.c.l.b16 %v1720
    %v1753 = vunpack.c.l.b16 %v1721
    %v1754 = vunpack.c.l.b16 %v1722
    %v1755 = vunpack.c.l.b16 %v1723
    %v1756 = vpack.c.b16 %v1741, %v1740
    %v1757 = vpack.c.b16 %v1743, %v1742
    %v1758 = vpack.c.b16 %v1745, %v1744
    %v1759 = vpack.c.b16 %v1747, %v1746
    %v1760 = vpack.c.b16 %v1749, %v1748
    %v1761 = vpack.c.b16 %v1751, %v1750
    %v1762 = vpack.c.b16 %v1753, %v1752
    %v1763 = vpack.c.b16 %v1755, %v1754
    %1772 = vmatprep.subr.bf16.mxu0 0
    %1773 = vmatpush1.bf16.msra.mxu0 %v1763
    %1774 = vmatprep.subr.bf16.mxu0 0
    %1775 = vmatpush1.bf16.msra.mxu0 %v1762
    %1776 = vmatprep.subr.bf16.mxu0 0
    %1777 = vmatpush1.bf16.msra.mxu0 %v1761
    %1778 = vmatprep.subr.bf16.mxu0 0
    %1779 = vmatpush1.bf16.msra.mxu0 %v1760
    %1780 = vmatprep.subr.bf16.mxu0 0
    %1781 = vmatpush1.bf16.msra.mxu0 %v1759
    %1782 = vmatprep.subr.bf16.mxu0 0
    %1783 = vmatpush1.bf16.msra.mxu0 %v1758
    %1784 = vmatprep.subr.bf16.mxu0 0
    %1785 = vmatpush1.bf16.msra.mxu0 %v1757
    %1786 = vmatprep.subr.bf16.mxu0 0
    %1787 = vmatpush1.bf16.msra.mxu0 %v1756
    %1788 = vmatprep.subr.bf16.mxu0 0
    %1789 = vmatpush2.bf16.msra.mxu0 0
    %1790 = vmatprep.subr.bf16.mxu0 0
    %1791 = vmatpush2.bf16.msra.mxu0 0
    %1792 = vmatprep.subr.bf16.mxu0 0
    %1793 = vmatpush2.bf16.msra.mxu0 0
    %1794 = vmatprep.subr.bf16.mxu0 0
    %1795 = vmatpush2.bf16.msra.mxu0 0
    %1796 = vmatprep.subr.bf16.mxu0 0
    %1797 = vmatpush2.bf16.msra.mxu0 0
    %1798 = vmatprep.subr.bf16.mxu0 0
    %1799 = vmatpush2.bf16.msra.mxu0 0
    %1800 = vmatprep.subr.bf16.mxu0 0
    %1801 = vmatpush2.bf16.msra.mxu0 0
    %1802 = vmatprep.subr.bf16.mxu0 0
    %1803 = vmatpush2.bf16.msra.mxu0 0
    %1804 = vmatprep.mubr.bf16.mxu0 0
    %1805 = vmatmul.mubr.bf16.gmra.mxu0 %v1706
    %v1806 = vpop.f32.mrf.mxu0
    %v1807 = vadd.f32 %v1595, %v1806
    %v1808 = vpop.f32.mrf.mxu0
    %v1809 = vpop.f32.mrf.mxu0
    %v1810 = vadd.f32 %v1596, %v1809
    %v1811 = vpop.f32.mrf.mxu0
    %1812 = vdwg.mxu0
    %1813 = vadd.xlane.f32.xlu0 %v1807
    %v1814 = vpop.xlane.xlu0 %1813
    %1815 = vadd.xlane.f32.xlu0 %v1810
    %v1816 = vpop.xlane.xlu0 %1815
    %v1817 = vmul.f32 %v1814, %v1562
    %v1818 = vmul.f32 %v1816, %v1562
    %v1819 = vmul.f32 %v1807, %v1807
    %v1820 = vmul.f32 %v1810, %v1810
    %1821 = vadd.xlane.f32.xlu0 %v1819
    %v1822 = vpop.xlane.xlu0 %1821
    %1823 = vadd.xlane.f32.xlu0 %v1820
    %v1824 = vpop.xlane.xlu0 %1823
    %v1825 = vmul.f32 %v1822, %v1562
    %v1826 = vmul.f32 %v1824, %v1562
    %v1827 = vmul.f32 %v1817, %v1817
    %v1828 = vmul.f32 %v1818, %v1818
    %v1829 = vsub.f32 %v1825, %v1827
    %v1830 = vsub.f32 %v1826, %v1828
    %v1831 = vsub.f32 %v1807, %v1817
    %v1832 = vsub.f32 %v1810, %v1818
    %v1833 = vadd.f32 %v1829, 1e-05
    %v1834 = vadd.f32 %v1830, 1e-05
    %v1835 = vrsqrt.pop %v1833
    %v1836 = vrsqrt.pop %v1834
    %v1837 = vmul.f32 %v1831, %v1835
    %v1838 = vmul.f32 %v1832, %v1836
    %v1839 = vlaneseq
    %v1840 = vshrl.u32 %v1839, 7
    %v1841 = vsub.s32 6, %v1840
    %v1842 = vrot.slane %v76, %v1841
    %v1843 = vmul.f32 %v1837, %v1842
    %v1844 = vmul.f32 %v1838, %v1842
    %v1845 = vlaneseq
    %v1846 = vshrl.u32 %v1845, 7
    %v1847 = vsub.s32 7, %v1846
    %v1848 = vrot.slane %v76, %v1847
    %v1849 = vadd.f32 %v1843, %v1848
    %v1850 = vadd.f32 %v1844, %v1848
    %1851 = vst [vmem:[#allocation10] sm:$0xff] %v1849
    %1852 = vst [vmem:[#allocation10 + $0x8] sm:$0xff] %v1850
    // Predicated region
    $region34: #{tpu_custom_call.1} parent=1 // pred_check
      _
    $region35: #{tpu_custom_call.1} parent=1 // pred_check_branch
      %1854 = sbr.rel (0) target = $region37
    $region36: #{tpu_custom_call.1} parent=1 // pred_region
      %s1856 = ssub.s32 256, 256
      %1857 = vsyncadd [#allocation4], %s1856
      %s1858 = sshll.u32 [#allocation10], 4
      %s1859 = int_to_ptr.vmem [resolvable:$true] %s1858
      %1864 = dma.vmem_to_hbm [thread:$0]  %s1859, 256, %s4, [#allocation4], 128, 128, 8
    $region37: #{tpu_custom_call.1} parent=1 // pred_fallthru
      _
    // Predicated region
    $region38: #{tpu_custom_call.1} parent=1 // pred_check
      _
    $region39: #{tpu_custom_call.1} parent=1 // pred_check_branch
      %1866 = sbr.rel (0) target = $region41
    $region40: #{tpu_custom_call.1} parent=1 // pred_region
      %1867 = dma.done [#allocation4], 256
    $region41: #{tpu_custom_call.1} parent=1 // pred_fallthru
      _
    %1868 = vsyncpa [#allocation3], 1
    %1869 = vsyncpa [#allocation6], 1
    %1870 = vsyncpa [#allocation9], 1
    %1871 = vsyncpa [#allocation4], 1

</llo_original>
